<compile_context>
chip_gen: v7x
topology: tpu7x:2x2x1
jax: 0.10.0
libtpu: 0.0.40
codegen_flags: <defaults>
</compile_context>

<pallas_src>
import functools

import jax
import jax.numpy as jnp
from jax.experimental import pallas as pl
from jax.experimental.pallas import tpu as pltpu


# ----------------------------------------------------------------------------
# Kernel 1: 3x3 conv (stride 1, pad 1) + bias + ReLU + 2x2 max-pool, per sample.
# ----------------------------------------------------------------------------
def _conv_relu_pool_kernel(x_ref, w_ref, b_ref, sel_ref, o_ref,
                           *, H, W, CIN, COUT, KH, KW, BR):
    # x_ref  : (1, CIN, H+2, W+2)     padded per-channel input planes (f32)
    # w_ref  : (KW*COUT, CIN*KH)      conv weights, rows (dx, cout), cols (cin, dy)
    # b_ref  : (COUT, 1)              conv bias column
    # sel_ref: (W-1, W//2)            0/1 even-column selection matrix (lane compaction)
    # o_ref  : (1, H//2, COUT, W//2)  pooled activations (bf16)
    H2, W2 = H // 2, W // 2
    # Bias broadcast hoisted out of the row loop (JAX does not CSE broadcast_in_dim).
    bias = jnp.broadcast_to(b_ref[...], (COUT, W2))

    def band_body(bi, carry):
        hb = pl.multiple_of(bi * (2 * BR), 2 * BR)         # first conv row of this band
        # Per-channel row bands (2*BR rows + halo); dynamic slice on the sublane axis.
        xrows = [x_ref[0, c, pl.ds(hb, 2 * BR + KH - 1), :] for c in range(CIN)]

        for r in range(BR):                                  # BR pooled rows per iteration
            ys = []
            for j in (2 * r, 2 * r + 1):                     # the two conv rows of the pair
                # A[(cin,dy), u] = x_pad[cin, hb+j+dy, u] -- 3 sublane-block copies,
                # every piece full lane width (no 1-lane im2col relayout).
                a = jnp.concatenate([xc[j:j + KH, :] for xc in xrows], axis=0)
                # (KW*COUT, WP): per-column partial sums for all 3 dx taps at once.
                yext = jnp.dot(w_ref[...], a, preferred_element_type=jnp.float32)
                # Combine the dx taps with shifted slices (2 adds).
                y = (yext[0 * COUT:1 * COUT, 0:W]
                     + yext[1 * COUT:2 * COUT, 1:W + 1]
                     + yext[2 * COUT:3 * COUT, 2:W + 2])     # (COUT, W)
                ys.append(y)
            rmax = jnp.maximum(ys[0], ys[1])                 # row-pair max (elementwise)
            z = jnp.maximum(rmax[:, 0:W - 1], rmax[:, 1:W])  # neighbour-column max
            # Take every even column via one tiny selection matmul (O(1) relayout per row,
            # replaces v2's O(W2) lane-concat; lane-strided value slices avoided on purpose).
            pooled = jnp.dot(z, sel_ref[...], preferred_element_type=jnp.float32)
            # bias + ReLU commute with max-pool -> applied once on the pooled tile.
            pooled = jnp.maximum(pooled + bias, 0.0)
            o_ref[0, bi * BR + r] = pooled.astype(o_ref.dtype)   # dense (COUT, W2) store
        return carry

    jax.lax.fori_loop(0, H2 // BR, band_body, 0)


def conv_relu_pool(x_pad, w_mat, b_col, sel):
    N, CIN, HP, WP = x_pad.shape
    KH = KW = 3
    H, W = HP - (KH - 1), WP - (KW - 1)
    assert H % 2 == 0 and W % 2 == 0, "MaxPool2d(2) path assumes even H, W"
    H2, W2 = H // 2, W // 2
    COUT = b_col.shape[0]
    BR = next(br for br in (4, 2, 1) if H2 % br == 0)        # pooled rows per iteration
    kernel = functools.partial(_conv_relu_pool_kernel, H=H, W=W, CIN=CIN,
                               COUT=COUT, KH=KH, KW=KW, BR=BR)
    return pl.pallas_call(
        kernel,
        out_shape=jax.ShapeDtypeStruct((N, H2, COUT, W2), jnp.bfloat16),
        grid_spec=pltpu.PrefetchScalarGridSpec(
            num_scalar_prefetch=0,
            grid=(N,),
            in_specs=[
                pl.BlockSpec((1, CIN, HP, WP), lambda n: (n, 0, 0, 0)),
                pl.BlockSpec((KW * COUT, CIN * KH), lambda n: (0, 0)),
                pl.BlockSpec((COUT, 1), lambda n: (0, 0)),
                pl.BlockSpec((W - 1, W2), lambda n: (0, 0)),
            ],
            out_specs=pl.BlockSpec((1, H2, COUT, W2), lambda n: (n, 0, 0, 0)),
        ),
        compiler_params=pltpu.CompilerParams(
            dimension_semantics=("parallel",),               # batch across v7x's 2 TCs
            vmem_limit_bytes=24 * 1024 * 1024),
    )(x_pad, w_mat, b_col, sel)


# ----------------------------------------------------------------------------
# Kernel 2: K-tiled Linear -> ReLU -> Linear; fc1 hidden dim split across a
#           leading "parallel" grid axis (both TensorCores stream half the weight).
# ----------------------------------------------------------------------------
def _mlp_kernel(x_ref, w1_ref, b1_ref, w2_ref, o_ref, acc_ref):
    k = pl.program_id(1)

    @pl.when(k == 0)
    def _():
        acc_ref[...] = jnp.zeros_like(acc_ref)

    # x is already bf16 (conv output) -> no per-step activation cast.
    acc_ref[...] += jnp.dot(x_ref[...], w1_ref[0],
                            preferred_element_type=jnp.float32)

    @pl.when(k == pl.num_programs(1) - 1)
    def _():
        h = jnp.maximum(acc_ref[...] + b1_ref[0], 0.0)
        o_ref[0] = jnp.dot(h, w2_ref[0], preferred_element_type=jnp.float32)


def mlp(x, w1p, b1p, w2p, b2):
    # x   : (N, F) bf16          w1p : (P, F, H1/P) bf16     b1p : (P, 1, H1/P) f32
    # w2p : (P, H1/P, NC) f32    b2  : (1, NC) f32
    N, F = x.shape
    P, _, HH = w1p.shape
    NC = w2p.shape[-1]
    # Stream the fc1 weight through VMEM in K chunks.  Candidates include divisors of the
    # module's nominal F = 16*112*112 = 2^12*49 so nominal chunks are 1.6-3.5 MB bf16.
    tk = next((t for t in (28672, 16384, 12544, 8192, 4096, 2048, 1024, 512, 256, 128)
               if F % t == 0 and F // t >= 2), F)
    partial = pl.pallas_call(
        _mlp_kernel,
        out_shape=jax.ShapeDtypeStruct((P, N, NC), jnp.float32),
        grid_spec=pltpu.PrefetchScalarGridSpec(
            num_scalar_prefetch=0,
            grid=(P, F // tk),
            in_specs=[
                pl.BlockSpec((N, tk), lambda p, k: (0, k)),
                pl.BlockSpec((1, tk, HH), lambda p, k: (p, k, 0)),   # contiguous DMA chunk
                pl.BlockSpec((1, 1, HH), lambda p, k: (p, 0, 0)),
                pl.BlockSpec((1, HH, NC), lambda p, k: (p, 0, 0)),
            ],
            out_specs=pl.BlockSpec((1, N, NC), lambda p, k: (p, 0, 0)),
            scratch_shapes=[pltpu.VMEM((N, HH), jnp.float32)],
        ),
        compiler_params=pltpu.CompilerParams(
            dimension_semantics=("parallel", "arbitrary"),   # hidden split || , K reduction
            vmem_limit_bytes=48 * 1024 * 1024),
    )(x, w1p, b1p, w2p)
    # Tiny cross-half combine + output bias.
    return partial.sum(axis=0) + b2


# ----------------------------------------------------------------------------
# Parameter repack (host-side, once) + full forward pass.
# ----------------------------------------------------------------------------
def prepare_params(params, H, W):
    conv_w, conv_b, fc1_w, fc1_b, fc2_w, fc2_b = params
    COUT, CIN, KH, KW = conv_w.shape
    H2, W2 = H // 2, W // 2
    # OIHW -> W_mat[(dx, cout), (cin, dy)] for the kernel's transposed conv matmul.
    w_mat = jnp.transpose(conv_w, (3, 0, 1, 2)).reshape(KW * COUT, CIN * KH)
    b_col = conv_b.reshape(COUT, 1)
    # 0/1 matrix selecting every even column (lane compaction for the 2x2 pool).
    sel = (jnp.arange(W - 1)[:, None] == 2 * jnp.arange(W2)[None, :]).astype(jnp.float32)

    hid = fc1_w.shape[0]
    P = 2 if hid % 2 == 0 else 1                    # hidden split across TensorCores
    # PyTorch fc1 consumes NCHW-flattened (cout, h2, w2); the conv kernel emits (h2, cout,
    # w2).  Permute fc1's input dim once host-side, transpose to (F, hid), split the hidden
    # dim into P contiguous slabs, cast to bf16 for streaming.
    w1 = (fc1_w.reshape(hid, COUT, H2, W2)
               .transpose(0, 2, 1, 3)
               .reshape(hid, -1).T)                 # (F, hid) in the kernel feature order
    F = w1.shape[0]
    w1p = jnp.transpose(w1.reshape(F, P, hid // P), (1, 0, 2)).astype(jnp.bfloat16)
    b1p = fc1_b.reshape(P, 1, hid // P)
    w2p = fc2_w.T.reshape(P, hid // P, -1)          # (P, hid/P, NC), kept f32
    b2 = fc2_b.reshape(1, -1)
    return (w_mat, b_col, sel, w1p, b1p, w2p, b2)


def simple_card_classifier_forward(x_nchw, prep):
    w_mat, b_col, sel, w1p, b1p, w2p, b2 = prep
    # Conv2d(padding=1): pad spatial dims; keep compact NCHW planes (no transpose needed).
    x_pad = jnp.pad(x_nchw, ((0, 0), (0, 0), (1, 1), (1, 1)))
    pooled = conv_relu_pool(x_pad, w_mat, b_col, sel)   # (N, H2, COUT, W2) bf16
    feat = pooled.reshape(pooled.shape[0], -1)          # no-copy trailing-dim flatten
    return mlp(feat, w1p, b1p, w2p, b2)


# ----------------------------------------------------------------------------
# Pure-JAX reference (for correctness check).
# ----------------------------------------------------------------------------
def reference_forward(x_nchw, params):
    conv_w, conv_b, fc1_w, fc1_b, fc2_w, fc2_b = params
    y = jax.lax.conv_general_dilated(
        x_nchw, conv_w, window_strides=(1, 1), padding=((1, 1), (1, 1)),
        dimension_numbers=("NCHW", "OIHW", "NCHW"))
    y = jnp.maximum(y + conv_b[None, :, None, None], 0.0)
    N, C, H, W = y.shape
    y = y.reshape(N, C, H // 2, 2, W // 2, 2).max(axis=(3, 5))
    f = y.reshape(N, -1)
    h = jnp.maximum(f @ fc1_w.T + fc1_b, 0.0)
    return h @ fc2_w.T + fc2_b


if __name__ == "__main__":
    # Small, module-consistent shapes (nominal module uses 3x224x224 -> F = 16*112*112).
    N, CIN, H, W = 2, 3, 16, 16
    COUT, HIDDEN, NUM_CLASSES = 16, 128, 53
    F = COUT * (H // 2) * (W // 2)   # 1024 here

    keys = jax.random.split(jax.random.PRNGKey(0), 7)
    conv_w = jax.random.normal(keys[0], (COUT, CIN, 3, 3), jnp.float32) * 0.1
    conv_b = jax.random.normal(keys[1], (COUT,), jnp.float32) * 0.1
    fc1_w = jax.random.normal(keys[2], (HIDDEN, F), jnp.float32) * 0.05
    fc1_b = jax.random.normal(keys[3], (HIDDEN,), jnp.float32) * 0.05
    fc2_w = jax.random.normal(keys[4], (NUM_CLASSES, HIDDEN), jnp.float32) * 0.05
    fc2_b = jax.random.normal(keys[5], (NUM_CLASSES,), jnp.float32) * 0.05
    params = (conv_w, conv_b, fc1_w, fc1_b, fc2_w, fc2_b)

    x = jax.random.normal(keys[6], (N, CIN, H, W), jnp.float32)

    prep = prepare_params(params, H, W)
    out = jax.block_until_ready(jax.jit(simple_card_classifier_forward)(x, prep))

    ref = jax.block_until_ready(reference_forward(x, params))
    assert out.shape == (N, NUM_CLASSES), out.shape
    assert bool(jnp.all(jnp.isfinite(out)))
    # bf16 activation/weight streaming in the MLP -> slightly looser tolerance than f32.
    assert bool(jnp.allclose(out, ref, atol=5e-2, rtol=5e-2)), (
        float(jnp.max(jnp.abs(out - ref))))

    print("KERNEL_OK")
</pallas_src>

<mosaic_0001>
module attributes {stable_mosaic.version = 11 : i64} {
  func.func @_conv_relu_pool_kernel(%arg0: i32, %arg1: memref<1x3x18x18xf32, #tpu.memory_space<vmem>>, %arg2: memref<48x9xf32, #tpu.memory_space<vmem>>, %arg3: memref<16x1xf32, #tpu.memory_space<vmem>>, %arg4: memref<15x8xf32, #tpu.memory_space<vmem>>, %arg5: memref<1x8x16x8xbf16, #tpu.memory_space<vmem>>) attributes {dimension_semantics = [#tpu.dimension_semantics<parallel>], iteration_bounds = array<i64: 2>, scalar_prefetch = 0 : i64, scratch_operands = 0 : i64, tpu.core_type = #tpu.core_type<tc>, window_params = [{transform_indices = @transform_0, window_bounds = array<i64: 1, 3, 18, 18>}, {pipeline_mode = #tpu.pipeline_mode<synchronous>, transform_indices = @transform_1, window_bounds = array<i64: 48, 9>}, {pipeline_mode = #tpu.pipeline_mode<synchronous>, transform_indices = @transform_2, window_bounds = array<i64: 16, 1>}, {pipeline_mode = #tpu.pipeline_mode<synchronous>, transform_indices = @transform_3, window_bounds = array<i64: 15, 8>}, {transform_indices = @transform_4, window_bounds = array<i64: 1, 8, 16, 8>}]} {
    %c0 = arith.constant 0 : index
    %c0_0 = arith.constant 0 : index
    %0 = vector.load %arg3[%c0, %c0_0] : memref<16x1xf32, #tpu.memory_space<vmem>>, vector<16x1xf32>
    %1 = vector.shape_cast %0 : vector<16x1xf32> to vector<16x1xf32>
    %2 = vector.broadcast %1 : vector<16x1xf32> to vector<16x8xf32>
    %c0_i32 = arith.constant 0 : i32
    %c2_i32 = arith.constant 2 : i32
    %3 = arith.addi %c0_i32, %c2_i32 : i32
    %c1_i32 = arith.constant 1 : i32
    scf.for %arg6 = %c0_i32 to %3 step %c1_i32  : i32 {
      %c8_i32 = arith.constant 8 : i32
      %4 = arith.muli %arg6, %c8_i32 : i32
      %5 = tpu.assume_multiple %4, 8 : i32
      %c0_2 = arith.constant 0 : index
      %c0_3 = arith.constant 0 : index
      %6 = arith.index_cast %5 : i32 to index
      %c0_4 = arith.constant 0 : index
      %7 = vector.load %arg1[%c0_2, %c0_3, %6, %c0_4] : memref<1x3x18x18xf32, #tpu.memory_space<vmem>>, vector<1x1x10x18xf32>
      %8 = vector.shape_cast %7 : vector<1x1x10x18xf32> to vector<10x18xf32>
      %c0_5 = arith.constant 0 : index
      %c1 = arith.constant 1 : index
      %9 = arith.index_cast %5 : i32 to index
      %c0_6 = arith.constant 0 : index
      %10 = vector.load %arg1[%c0_5, %c1, %9, %c0_6] : memref<1x3x18x18xf32, #tpu.memory_space<vmem>>, vector<1x1x10x18xf32>
      %11 = vector.shape_cast %10 : vector<1x1x10x18xf32> to vector<10x18xf32>
      %c0_7 = arith.constant 0 : index
      %c2 = arith.constant 2 : index
      %12 = arith.index_cast %5 : i32 to index
      %c0_8 = arith.constant 0 : index
      %13 = vector.load %arg1[%c0_7, %c2, %12, %c0_8] : memref<1x3x18x18xf32, #tpu.memory_space<vmem>>, vector<1x1x10x18xf32>
      %14 = vector.shape_cast %13 : vector<1x1x10x18xf32> to vector<10x18xf32>
      %15 = vector.extract_strided_slice %8 {offsets = [0, 0], sizes = [3, 18], strides = [1, 1]} : vector<10x18xf32> to vector<3x18xf32>
      %16 = vector.extract_strided_slice %11 {offsets = [0, 0], sizes = [3, 18], strides = [1, 1]} : vector<10x18xf32> to vector<3x18xf32>
      %17 = vector.extract_strided_slice %14 {offsets = [0, 0], sizes = [3, 18], strides = [1, 1]} : vector<10x18xf32> to vector<3x18xf32>
      %18 = tpu.concatenate %15, %16, %17 in 0 : vector<3x18xf32>, vector<3x18xf32>, vector<3x18xf32> -> vector<9x18xf32>
      %c0_9 = arith.constant 0 : index
      %c0_10 = arith.constant 0 : index
      %19 = vector.load %arg2[%c0_9, %c0_10] : memref<48x9xf32, #tpu.memory_space<vmem>>, vector<48x9xf32>
      %cst = arith.constant dense<0.000000e+00> : vector<48x18xf32>
      %20 = tpu.matmul %19, %18, %cst {dimension_numbers = #tpu.dot_dimension_numbers<[1], [0], [0], [1], [0, 0, 1, 1], [], []>} : vector<48x9xf32>, vector<9x18xf32>, vector<48x18xf32> -> vector<48x18xf32>
      %21 = vector.extract_strided_slice %20 {offsets = [0, 0], sizes = [16, 16], strides = [1, 1]} : vector<48x18xf32> to vector<16x16xf32>
      %22 = vector.extract_strided_slice %20 {offsets = [16, 1], sizes = [16, 16], strides = [1, 1]} : vector<48x18xf32> to vector<16x16xf32>
      %23 = arith.addf %21, %22 : vector<16x16xf32>
      %24 = vector.extract_strided_slice %20 {offsets = [32, 2], sizes = [16, 16], strides = [1, 1]} : vector<48x18xf32> to vector<16x16xf32>
      %25 = arith.addf %23, %24 : vector<16x16xf32>
      %26 = vector.extract_strided_slice %8 {offsets = [1, 0], sizes = [3, 18], strides = [1, 1]} : vector<10x18xf32> to vector<3x18xf32>
      %27 = vector.extract_strided_slice %11 {offsets = [1, 0], sizes = [3, 18], strides = [1, 1]} : vector<10x18xf32> to vector<3x18xf32>
      %28 = vector.extract_strided_slice %14 {offsets = [1, 0], sizes = [3, 18], strides = [1, 1]} : vector<10x18xf32> to vector<3x18xf32>
      %29 = tpu.concatenate %26, %27, %28 in 0 : vector<3x18xf32>, vector<3x18xf32>, vector<3x18xf32> -> vector<9x18xf32>
      %c0_11 = arith.constant 0 : index
      %c0_12 = arith.constant 0 : index
      %30 = vector.load %arg2[%c0_11, %c0_12] : memref<48x9xf32, #tpu.memory_space<vmem>>, vector<48x9xf32>
      %cst_13 = arith.constant dense<0.000000e+00> : vector<48x18xf32>
      %31 = tpu.matmul %30, %29, %cst_13 {dimension_numbers = #tpu.dot_dimension_numbers<[1], [0], [0], [1], [0, 0, 1, 1], [], []>} : vector<48x9xf32>, vector<9x18xf32>, vector<48x18xf32> -> vector<48x18xf32>
      %32 = vector.extract_strided_slice %31 {offsets = [0, 0], sizes = [16, 16], strides = [1, 1]} : vector<48x18xf32> to vector<16x16xf32>
      %33 = vector.extract_strided_slice %31 {offsets = [16, 1], sizes = [16, 16], strides = [1, 1]} : vector<48x18xf32> to vector<16x16xf32>
      %34 = arith.addf %32, %33 : vector<16x16xf32>
      %35 = vector.extract_strided_slice %31 {offsets = [32, 2], sizes = [16, 16], strides = [1, 1]} : vector<48x18xf32> to vector<16x16xf32>
      %36 = arith.addf %34, %35 : vector<16x16xf32>
      %37 = arith.maximumf %25, %36 : vector<16x16xf32>
      %38 = vector.extract_strided_slice %37 {offsets = [0, 0], sizes = [16, 15], strides = [1, 1]} : vector<16x16xf32> to vector<16x15xf32>
      %39 = vector.extract_strided_slice %37 {offsets = [0, 1], sizes = [16, 15], strides = [1, 1]} : vector<16x16xf32> to vector<16x15xf32>
      %40 = arith.maximumf %38, %39 : vector<16x15xf32>
      %c0_14 = arith.constant 0 : index
      %c0_15 = arith.constant 0 : index
      %41 = vector.load %arg4[%c0_14, %c0_15] : memref<15x8xf32, #tpu.memory_space<vmem>>, vector<15x8xf32>
      %cst_16 = arith.constant dense<0.000000e+00> : vector<16x8xf32>
      %42 = tpu.matmul %40, %41, %cst_16 {dimension_numbers = #tpu.dot_dimension_numbers<[1], [0], [0], [1], [0, 0, 1, 1], [], []>} : vector<16x15xf32>, vector<15x8xf32>, vector<16x8xf32> -> vector<16x8xf32>
      %43 = arith.addf %42, %2 : vector<16x8xf32>
      %cst_17 = arith.constant 0.000000e+00 : f32
      %44 = vector.broadcast %cst_17 : f32 to vector<16x8xf32>
      %45 = arith.maximumf %43, %44 : vector<16x8xf32>
      %46 = arith.truncf %45 : vector<16x8xf32> to vector<16x8xbf16>
      %c4_i32 = arith.constant 4 : i32
      %47 = arith.muli %arg6, %c4_i32 : i32
      %c0_i32_18 = arith.constant 0 : i32
      %48 = arith.addi %47, %c0_i32_18 : i32
      %c0_19 = arith.constant 0 : index
      %49 = arith.index_cast %48 : i32 to index
      %c0_20 = arith.constant 0 : index
      %c0_21 = arith.constant 0 : index
      %50 = vector.load %arg5[%c0_19, %49, %c0_20, %c0_21] : memref<1x8x16x8xbf16, #tpu.memory_space<vmem>>, vector<1x1x16x8xbf16>
      %51 = vector.shape_cast %50 : vector<1x1x16x8xbf16> to vector<16x8xbf16>
      %52 = vector.shape_cast %46 : vector<16x8xbf16> to vector<1x1x16x8xbf16>
      tpu.vector_store %arg5[%c0_19, %49, %c0_20, %c0_21], %52 {strides = array<i32>} : memref<1x8x16x8xbf16, #tpu.memory_space<vmem>>, vector<1x1x16x8xbf16>,
      %53 = vector.extract_strided_slice %8 {offsets = [2, 0], sizes = [3, 18], strides = [1, 1]} : vector<10x18xf32> to vector<3x18xf32>
      %54 = vector.extract_strided_slice %11 {offsets = [2, 0], sizes = [3, 18], strides = [1, 1]} : vector<10x18xf32> to vector<3x18xf32>
      %55 = vector.extract_strided_slice %14 {offsets = [2, 0], sizes = [3, 18], strides = [1, 1]} : vector<10x18xf32> to vector<3x18xf32>
      %56 = tpu.concatenate %53, %54, %55 in 0 : vector<3x18xf32>, vector<3x18xf32>, vector<3x18xf32> -> vector<9x18xf32>
      %c0_22 = arith.constant 0 : index
      %c0_23 = arith.constant 0 : index
      %57 = vector.load %arg2[%c0_22, %c0_23] : memref<48x9xf32, #tpu.memory_space<vmem>>, vector<48x9xf32>
      %cst_24 = arith.constant dense<0.000000e+00> : vector<48x18xf32>
      %58 = tpu.matmul %57, %56, %cst_24 {dimension_numbers = #tpu.dot_dimension_numbers<[1], [0], [0], [1], [0, 0, 1, 1], [], []>} : vector<48x9xf32>, vector<9x18xf32>, vector<48x18xf32> -> vector<48x18xf32>
      %59 = vector.extract_strided_slice %58 {offsets = [0, 0], sizes = [16, 16], strides = [1, 1]} : vector<48x18xf32> to vector<16x16xf32>
      %60 = vector.extract_strided_slice %58 {offsets = [16, 1], sizes = [16, 16], strides = [1, 1]} : vector<48x18xf32> to vector<16x16xf32>
      %61 = arith.addf %59, %60 : vector<16x16xf32>
      %62 = vector.extract_strided_slice %58 {offsets = [32, 2], sizes = [16, 16], strides = [1, 1]} : vector<48x18xf32> to vector<16x16xf32>
      %63 = arith.addf %61, %62 : vector<16x16xf32>
      %64 = vector.extract_strided_slice %8 {offsets = [3, 0], sizes = [3, 18], strides = [1, 1]} : vector<10x18xf32> to vector<3x18xf32>
      %65 = vector.extract_strided_slice %11 {offsets = [3, 0], sizes = [3, 18], strides = [1, 1]} : vector<10x18xf32> to vector<3x18xf32>
      %66 = vector.extract_strided_slice %14 {offsets = [3, 0], sizes = [3, 18], strides = [1, 1]} : vector<10x18xf32> to vector<3x18xf32>
      %67 = tpu.concatenate %64, %65, %66 in 0 : vector<3x18xf32>, vector<3x18xf32>, vector<3x18xf32> -> vector<9x18xf32>
      %c0_25 = arith.constant 0 : index
      %c0_26 = arith.constant 0 : index
      %68 = vector.load %arg2[%c0_25, %c0_26] : memref<48x9xf32, #tpu.memory_space<vmem>>, vector<48x9xf32>
      %cst_27 = arith.constant dense<0.000000e+00> : vector<48x18xf32>
      %69 = tpu.matmul %68, %67, %cst_27 {dimension_numbers = #tpu.dot_dimension_numbers<[1], [0], [0], [1], [0, 0, 1, 1], [], []>} : vector<48x9xf32>, vector<9x18xf32>, vector<48x18xf32> -> vector<48x18xf32>
      %70 = vector.extract_strided_slice %69 {offsets = [0, 0], sizes = [16, 16], strides = [1, 1]} : vector<48x18xf32> to vector<16x16xf32>
      %71 = vector.extract_strided_slice %69 {offsets = [16, 1], sizes = [16, 16], strides = [1, 1]} : vector<48x18xf32> to vector<16x16xf32>
      %72 = arith.addf %70, %71 : vector<16x16xf32>
      %73 = vector.extract_strided_slice %69 {offsets = [32, 2], sizes = [16, 16], strides = [1, 1]} : vector<48x18xf32> to vector<16x16xf32>
      %74 = arith.addf %72, %73 : vector<16x16xf32>
      %75 = arith.maximumf %63, %74 : vector<16x16xf32>
      %76 = vector.extract_strided_slice %75 {offsets = [0, 0], sizes = [16, 15], strides = [1, 1]} : vector<16x16xf32> to vector<16x15xf32>
      %77 = vector.extract_strided_slice %75 {offsets = [0, 1], sizes = [16, 15], strides = [1, 1]} : vector<16x16xf32> to vector<16x15xf32>
      %78 = arith.maximumf %76, %77 : vector<16x15xf32>
      %c0_28 = arith.constant 0 : index
      %c0_29 = arith.constant 0 : index
      %79 = vector.load %arg4[%c0_28, %c0_29] : memref<15x8xf32, #tpu.memory_space<vmem>>, vector<15x8xf32>
      %cst_30 = arith.constant dense<0.000000e+00> : vector<16x8xf32>
      %80 = tpu.matmul %78, %79, %cst_30 {dimension_numbers = #tpu.dot_dimension_numbers<[1], [0], [0], [1], [0, 0, 1, 1], [], []>} : vector<16x15xf32>, vector<15x8xf32>, vector<16x8xf32> -> vector<16x8xf32>
      %81 = arith.addf %80, %2 : vector<16x8xf32>
      %cst_31 = arith.constant 0.000000e+00 : f32
      %82 = vector.broadcast %cst_31 : f32 to vector<16x8xf32>
      %83 = arith.maximumf %81, %82 : vector<16x8xf32>
      %84 = arith.truncf %83 : vector<16x8xf32> to vector<16x8xbf16>
      %c4_i32_32 = arith.constant 4 : i32
      %85 = arith.muli %arg6, %c4_i32_32 : i32
      %c1_i32_33 = arith.constant 1 : i32
      %86 = arith.addi %85, %c1_i32_33 : i32
      %c0_34 = arith.constant 0 : index
      %87 = arith.index_cast %86 : i32 to index
      %c0_35 = arith.constant 0 : index
      %c0_36 = arith.constant 0 : index
      %88 = vector.load %arg5[%c0_34, %87, %c0_35, %c0_36] : memref<1x8x16x8xbf16, #tpu.memory_space<vmem>>, vector<1x1x16x8xbf16>
      %89 = vector.shape_cast %88 : vector<1x1x16x8xbf16> to vector<16x8xbf16>
      %90 = vector.shape_cast %84 : vector<16x8xbf16> to vector<1x1x16x8xbf16>
      tpu.vector_store %arg5[%c0_34, %87, %c0_35, %c0_36], %90 {strides = array<i32>} : memref<1x8x16x8xbf16, #tpu.memory_space<vmem>>, vector<1x1x16x8xbf16>,
      %91 = vector.extract_strided_slice %8 {offsets = [4, 0], sizes = [3, 18], strides = [1, 1]} : vector<10x18xf32> to vector<3x18xf32>
      %92 = vector.extract_strided_slice %11 {offsets = [4, 0], sizes = [3, 18], strides = [1, 1]} : vector<10x18xf32> to vector<3x18xf32>
      %93 = vector.extract_strided_slice %14 {offsets = [4, 0], sizes = [3, 18], strides = [1, 1]} : vector<10x18xf32> to vector<3x18xf32>
      %94 = tpu.concatenate %91, %92, %93 in 0 : vector<3x18xf32>, vector<3x18xf32>, vector<3x18xf32> -> vector<9x18xf32>
      %c0_37 = arith.constant 0 : index
      %c0_38 = arith.constant 0 : index
      %95 = vector.load %arg2[%c0_37, %c0_38] : memref<48x9xf32, #tpu.memory_space<vmem>>, vector<48x9xf32>
      %cst_39 = arith.constant dense<0.000000e+00> : vector<48x18xf32>
      %96 = tpu.matmul %95, %94, %cst_39 {dimension_numbers = #tpu.dot_dimension_numbers<[1], [0], [0], [1], [0, 0, 1, 1], [], []>} : vector<48x9xf32>, vector<9x18xf32>, vector<48x18xf32> -> vector<48x18xf32>
      %97 = vector.extract_strided_slice %96 {offsets = [0, 0], sizes = [16, 16], strides = [1, 1]} : vector<48x18xf32> to vector<16x16xf32>
      %98 = vector.extract_strided_slice %96 {offsets = [16, 1], sizes = [16, 16], strides = [1, 1]} : vector<48x18xf32> to vector<16x16xf32>
      %99 = arith.addf %97, %98 : vector<16x16xf32>
      %100 = vector.extract_strided_slice %96 {offsets = [32, 2], sizes = [16, 16], strides = [1, 1]} : vector<48x18xf32> to vector<16x16xf32>
      %101 = arith.addf %99, %100 : vector<16x16xf32>
      %102 = vector.extract_strided_slice %8 {offsets = [5, 0], sizes = [3, 18], strides = [1, 1]} : vector<10x18xf32> to vector<3x18xf32>
      %103 = vector.extract_strided_slice %11 {offsets = [5, 0], sizes = [3, 18], strides = [1, 1]} : vector<10x18xf32> to vector<3x18xf32>
      %104 = vector.extract_strided_slice %14 {offsets = [5, 0], sizes = [3, 18], strides = [1, 1]} : vector<10x18xf32> to vector<3x18xf32>
      %105 = tpu.concatenate %102, %103, %104 in 0 : vector<3x18xf32>, vector<3x18xf32>, vector<3x18xf32> -> vector<9x18xf32>
      %c0_40 = arith.constant 0 : index
      %c0_41 = arith.constant 0 : index
      %106 = vector.load %arg2[%c0_40, %c0_41] : memref<48x9xf32, #tpu.memory_space<vmem>>, vector<48x9xf32>
      %cst_42 = arith.constant dense<0.000000e+00> : vector<48x18xf32>
      %107 = tpu.matmul %106, %105, %cst_42 {dimension_numbers = #tpu.dot_dimension_numbers<[1], [0], [0], [1], [0, 0, 1, 1], [], []>} : vector<48x9xf32>, vector<9x18xf32>, vector<48x18xf32> -> vector<48x18xf32>
      %108 = vector.extract_strided_slice %107 {offsets = [0, 0], sizes = [16, 16], strides = [1, 1]} : vector<48x18xf32> to vector<16x16xf32>
      %109 = vector.extract_strided_slice %107 {offsets = [16, 1], sizes = [16, 16], strides = [1, 1]} : vector<48x18xf32> to vector<16x16xf32>
      %110 = arith.addf %108, %109 : vector<16x16xf32>
      %111 = vector.extract_strided_slice %107 {offsets = [32, 2], sizes = [16, 16], strides = [1, 1]} : vector<48x18xf32> to vector<16x16xf32>
      %112 = arith.addf %110, %111 : vector<16x16xf32>
      %113 = arith.maximumf %101, %112 : vector<16x16xf32>
      %114 = vector.extract_strided_slice %113 {offsets = [0, 0], sizes = [16, 15], strides = [1, 1]} : vector<16x16xf32> to vector<16x15xf32>
      %115 = vector.extract_strided_slice %113 {offsets = [0, 1], sizes = [16, 15], strides = [1, 1]} : vector<16x16xf32> to vector<16x15xf32>
      %116 = arith.maximumf %114, %115 : vector<16x15xf32>
      %c0_43 = arith.constant 0 : index
      %c0_44 = arith.constant 0 : index
      %117 = vector.load %arg4[%c0_43, %c0_44] : memref<15x8xf32, #tpu.memory_space<vmem>>, vector<15x8xf32>
      %cst_45 = arith.constant dense<0.000000e+00> : vector<16x8xf32>
      %118 = tpu.matmul %116, %117, %cst_45 {dimension_numbers = #tpu.dot_dimension_numbers<[1], [0], [0], [1], [0, 0, 1, 1], [], []>} : vector<16x15xf32>, vector<15x8xf32>, vector<16x8xf32> -> vector<16x8xf32>
      %119 = arith.addf %118, %2 : vector<16x8xf32>
      %cst_46 = arith.constant 0.000000e+00 : f32
      %120 = vector.broadcast %cst_46 : f32 to vector<16x8xf32>
      %121 = arith.maximumf %119, %120 : vector<16x8xf32>
      %122 = arith.truncf %121 : vector<16x8xf32> to vector<16x8xbf16>
      %c4_i32_47 = arith.constant 4 : i32
      %123 = arith.muli %arg6, %c4_i32_47 : i32
      %c2_i32_48 = arith.constant 2 : i32
      %124 = arith.addi %123, %c2_i32_48 : i32
      %c0_49 = arith.constant 0 : index
      %125 = arith.index_cast %124 : i32 to index
      %c0_50 = arith.constant 0 : index
      %c0_51 = arith.constant 0 : index
      %126 = vector.load %arg5[%c0_49, %125, %c0_50, %c0_51] : memref<1x8x16x8xbf16, #tpu.memory_space<vmem>>, vector<1x1x16x8xbf16>
      %127 = vector.shape_cast %126 : vector<1x1x16x8xbf16> to vector<16x8xbf16>
      %128 = vector.shape_cast %122 : vector<16x8xbf16> to vector<1x1x16x8xbf16>
      tpu.vector_store %arg5[%c0_49, %125, %c0_50, %c0_51], %128 {strides = array<i32>} : memref<1x8x16x8xbf16, #tpu.memory_space<vmem>>, vector<1x1x16x8xbf16>,
      %129 = vector.extract_strided_slice %8 {offsets = [6, 0], sizes = [3, 18], strides = [1, 1]} : vector<10x18xf32> to vector<3x18xf32>
      %130 = vector.extract_strided_slice %11 {offsets = [6, 0], sizes = [3, 18], strides = [1, 1]} : vector<10x18xf32> to vector<3x18xf32>
      %131 = vector.extract_strided_slice %14 {offsets = [6, 0], sizes = [3, 18], strides = [1, 1]} : vector<10x18xf32> to vector<3x18xf32>
      %132 = tpu.concatenate %129, %130, %131 in 0 : vector<3x18xf32>, vector<3x18xf32>, vector<3x18xf32> -> vector<9x18xf32>
      %c0_52 = arith.constant 0 : index
      %c0_53 = arith.constant 0 : index
      %133 = vector.load %arg2[%c0_52, %c0_53] : memref<48x9xf32, #tpu.memory_space<vmem>>, vector<48x9xf32>
      %cst_54 = arith.constant dense<0.000000e+00> : vector<48x18xf32>
      %134 = tpu.matmul %133, %132, %cst_54 {dimension_numbers = #tpu.dot_dimension_numbers<[1], [0], [0], [1], [0, 0, 1, 1], [], []>} : vector<48x9xf32>, vector<9x18xf32>, vector<48x18xf32> -> vector<48x18xf32>
      %135 = vector.extract_strided_slice %134 {offsets = [0, 0], sizes = [16, 16], strides = [1, 1]} : vector<48x18xf32> to vector<16x16xf32>
      %136 = vector.extract_strided_slice %134 {offsets = [16, 1], sizes = [16, 16], strides = [1, 1]} : vector<48x18xf32> to vector<16x16xf32>
      %137 = arith.addf %135, %136 : vector<16x16xf32>
      %138 = vector.extract_strided_slice %134 {offsets = [32, 2], sizes = [16, 16], strides = [1, 1]} : vector<48x18xf32> to vector<16x16xf32>
      %139 = arith.addf %137, %138 : vector<16x16xf32>
      %140 = vector.extract_strided_slice %8 {offsets = [7, 0], sizes = [3, 18], strides = [1, 1]} : vector<10x18xf32> to vector<3x18xf32>
      %141 = vector.extract_strided_slice %11 {offsets = [7, 0], sizes = [3, 18], strides = [1, 1]} : vector<10x18xf32> to vector<3x18xf32>
      %142 = vector.extract_strided_slice %14 {offsets = [7, 0], sizes = [3, 18], strides = [1, 1]} : vector<10x18xf32> to vector<3x18xf32>
      %143 = tpu.concatenate %140, %141, %142 in 0 : vector<3x18xf32>, vector<3x18xf32>, vector<3x18xf32> -> vector<9x18xf32>
      %c0_55 = arith.constant 0 : index
      %c0_56 = arith.constant 0 : index
      %144 = vector.load %arg2[%c0_55, %c0_56] : memref<48x9xf32, #tpu.memory_space<vmem>>, vector<48x9xf32>
      %cst_57 = arith.constant dense<0.000000e+00> : vector<48x18xf32>
      %145 = tpu.matmul %144, %143, %cst_57 {dimension_numbers = #tpu.dot_dimension_numbers<[1], [0], [0], [1], [0, 0, 1, 1], [], []>} : vector<48x9xf32>, vector<9x18xf32>, vector<48x18xf32> -> vector<48x18xf32>
      %146 = vector.extract_strided_slice %145 {offsets = [0, 0], sizes = [16, 16], strides = [1, 1]} : vector<48x18xf32> to vector<16x16xf32>
      %147 = vector.extract_strided_slice %145 {offsets = [16, 1], sizes = [16, 16], strides = [1, 1]} : vector<48x18xf32> to vector<16x16xf32>
      %148 = arith.addf %146, %147 : vector<16x16xf32>
      %149 = vector.extract_strided_slice %145 {offsets = [32, 2], sizes = [16, 16], strides = [1, 1]} : vector<48x18xf32> to vector<16x16xf32>
      %150 = arith.addf %148, %149 : vector<16x16xf32>
      %151 = arith.maximumf %139, %150 : vector<16x16xf32>
      %152 = vector.extract_strided_slice %151 {offsets = [0, 0], sizes = [16, 15], strides = [1, 1]} : vector<16x16xf32> to vector<16x15xf32>
      %153 = vector.extract_strided_slice %151 {offsets = [0, 1], sizes = [16, 15], strides = [1, 1]} : vector<16x16xf32> to vector<16x15xf32>
      %154 = arith.maximumf %152, %153 : vector<16x15xf32>
      %c0_58 = arith.constant 0 : index
      %c0_59 = arith.constant 0 : index
      %155 = vector.load %arg4[%c0_58, %c0_59] : memref<15x8xf32, #tpu.memory_space<vmem>>, vector<15x8xf32>
      %cst_60 = arith.constant dense<0.000000e+00> : vector<16x8xf32>
      %156 = tpu.matmul %154, %155, %cst_60 {dimension_numbers = #tpu.dot_dimension_numbers<[1], [0], [0], [1], [0, 0, 1, 1], [], []>} : vector<16x15xf32>, vector<15x8xf32>, vector<16x8xf32> -> vector<16x8xf32>
      %157 = arith.addf %156, %2 : vector<16x8xf32>
      %cst_61 = arith.constant 0.000000e+00 : f32
      %158 = vector.broadcast %cst_61 : f32 to vector<16x8xf32>
      %159 = arith.maximumf %157, %158 : vector<16x8xf32>
      %160 = arith.truncf %159 : vector<16x8xf32> to vector<16x8xbf16>
      %c4_i32_62 = arith.constant 4 : i32
      %161 = arith.muli %arg6, %c4_i32_62 : i32
      %c3_i32 = arith.constant 3 : i32
      %162 = arith.addi %161, %c3_i32 : i32
      %c0_63 = arith.constant 0 : index
      %163 = arith.index_cast %162 : i32 to index
      %c0_64 = arith.constant 0 : index
      %c0_65 = arith.constant 0 : index
      %164 = vector.load %arg5[%c0_63, %163, %c0_64, %c0_65] : memref<1x8x16x8xbf16, #tpu.memory_space<vmem>>, vector<1x1x16x8xbf16>
      %165 = vector.shape_cast %164 : vector<1x1x16x8xbf16> to vector<16x8xbf16>
      %166 = vector.shape_cast %160 : vector<16x8xbf16> to vector<1x1x16x8xbf16>
      tpu.vector_store %arg5[%c0_63, %163, %c0_64, %c0_65], %166 {strides = array<i32>} : memref<1x8x16x8xbf16, #tpu.memory_space<vmem>>, vector<1x1x16x8xbf16>,
    }
    %c2_i32_1 = arith.constant 2 : i32
    return
  }
  func.func @transform_0(%arg0: i32) -> (i32, i32, i32, i32) {
    %c0_i32 = arith.constant 0 : i32
    %c0_i32_0 = arith.constant 0 : i32
    %c0_i32_1 = arith.constant 0 : i32
    %c0_i32_2 = arith.constant 0 : i32
    return %arg0, %c0_i32, %c0_i32_0, %c0_i32_1 : i32, i32, i32, i32
  }
  func.func @transform_1(%arg0: i32) -> (i32, i32) {
    %c0_i32 = arith.constant 0 : i32
    %c0_i32_0 = arith.constant 0 : i32
    %c0_i32_1 = arith.constant 0 : i32
    return %c0_i32, %c0_i32_0 : i32, i32
  }
  func.func @transform_2(%arg0: i32) -> (i32, i32) {
    %c0_i32 = arith.constant 0 : i32
    %c0_i32_0 = arith.constant 0 : i32
    %c0_i32_1 = arith.constant 0 : i32
    return %c0_i32, %c0_i32_0 : i32, i32
  }
  func.func @transform_3(%arg0: i32) -> (i32, i32) {
    %c0_i32 = arith.constant 0 : i32
    %c0_i32_0 = arith.constant 0 : i32
    %c0_i32_1 = arith.constant 0 : i32
    return %c0_i32, %c0_i32_0 : i32, i32
  }
  func.func @transform_4(%arg0: i32) -> (i32, i32, i32, i32) {
    %c0_i32 = arith.constant 0 : i32
    %c0_i32_0 = arith.constant 0 : i32
    %c0_i32_1 = arith.constant 0 : i32
    %c0_i32_2 = arith.constant 0 : i32
    return %arg0, %c0_i32, %c0_i32_0, %c0_i32_1 : i32, i32, i32, i32
  }
}

module attributes {stable_mosaic.version = 11 : i64} {
  func.func @_mlp_kernel(%arg0: i32, %arg1: i32, %arg2: memref<2x512xbf16, #tpu.memory_space<vmem>>, %arg3: memref<1x512x64xbf16, #tpu.memory_space<vmem>>, %arg4: memref<1x1x64xf32, #tpu.memory_space<vmem>>, %arg5: memref<1x64x53xf32, #tpu.memory_space<vmem>>, %arg6: memref<1x2x53xf32, #tpu.memory_space<vmem>>, %arg7: memref<2x64xf32, #tpu.memory_space<vmem>>) attributes {dimension_semantics = [#tpu.dimension_semantics<parallel>, #tpu.dimension_semantics<arbitrary>], iteration_bounds = array<i64: 2, 2>, scalar_prefetch = 0 : i64, scratch_operands = 1 : i64, tpu.core_type = #tpu.core_type<tc>, window_params = [{transform_indices = @transform_0, window_bounds = array<i64: 2, 512>}, {transform_indices = @transform_1, window_bounds = array<i64: 1, 512, 64>}, {transform_indices = @transform_2, window_bounds = array<i64: 1, 1, 64>}, {transform_indices = @transform_3, window_bounds = array<i64: 1, 64, 53>}, {transform_indices = @transform_4, window_bounds = array<i64: 1, 2, 53>}]} {
    %c0_i32 = arith.constant 0 : i32
    %0 = arith.cmpi eq, %arg1, %c0_i32 : i32
    %1 = arith.extui %0 : i1 to i32
    %c0_i32_0 = arith.constant 0 : i32
    %2 = arith.cmpi ne, %1, %c0_i32_0 : i32
    scf.if %2 {
      %cst_10 = arith.constant 0.000000e+00 : f32
      %13 = vector.broadcast %cst_10 : f32 to vector<2x64xf32>
      %c0_11 = arith.constant 0 : index
      %c0_12 = arith.constant 0 : index
      %14 = vector.load %arg7[%c0_11, %c0_12] : memref<2x64xf32, #tpu.memory_space<vmem>>, vector<2x64xf32>
      tpu.vector_store %arg7[%c0_11, %c0_12], %13 {strides = array<i32>} : memref<2x64xf32, #tpu.memory_space<vmem>>, vector<2x64xf32>,
    } else {
    }
    %c0 = arith.constant 0 : index
    %c0_1 = arith.constant 0 : index
    %3 = vector.load %arg7[%c0, %c0_1] : memref<2x64xf32, #tpu.memory_space<vmem>>, vector<2x64xf32>
    %c0_2 = arith.constant 0 : index
    %c0_3 = arith.constant 0 : index
    %4 = vector.load %arg2[%c0_2, %c0_3] : memref<2x512xbf16, #tpu.memory_space<vmem>>, vector<2x512xbf16>
    %c0_4 = arith.constant 0 : index
    %c0_5 = arith.constant 0 : index
    %c0_6 = arith.constant 0 : index
    %5 = vector.load %arg3[%c0_4, %c0_5, %c0_6] : memref<1x512x64xbf16, #tpu.memory_space<vmem>>, vector<1x512x64xbf16>
    %6 = vector.shape_cast %5 : vector<1x512x64xbf16> to vector<512x64xbf16>
    %cst = arith.constant dense<0.000000e+00> : vector<2x64xf32>
    %7 = tpu.matmul %4, %6, %cst {dimension_numbers = #tpu.dot_dimension_numbers<[1], [0], [0], [1], [0, 0, 1, 1], [], []>} : vector<2x512xbf16>, vector<512x64xbf16>, vector<2x64xf32> -> vector<2x64xf32>
    %8 = arith.addf %3, %7 : vector<2x64xf32>
    %c0_7 = arith.constant 0 : index
    %c0_8 = arith.constant 0 : index
    %9 = vector.load %arg7[%c0_7, %c0_8] : memref<2x64xf32, #tpu.memory_space<vmem>>, vector<2x64xf32>
    tpu.vector_store %arg7[%c0_7, %c0_8], %8 {strides = array<i32>} : memref<2x64xf32, #tpu.memory_space<vmem>>, vector<2x64xf32>,
    %c1_i32 = arith.constant 1 : i32
    %10 = arith.cmpi eq, %arg1, %c1_i32 : i32
    %11 = arith.extui %10 : i1 to i32
    %c0_i32_9 = arith.constant 0 : i32
    %12 = arith.cmpi ne, %11, %c0_i32_9 : i32
    scf.if %12 {
      %c0_10 = arith.constant 0 : index
      %c0_11 = arith.constant 0 : index
      %13 = vector.load %arg7[%c0_10, %c0_11] : memref<2x64xf32, #tpu.memory_space<vmem>>, vector<2x64xf32>
      %c0_12 = arith.constant 0 : index
      %c0_13 = arith.constant 0 : index
      %c0_14 = arith.constant 0 : index
      %14 = vector.load %arg4[%c0_12, %c0_13, %c0_14] : memref<1x1x64xf32, #tpu.memory_space<vmem>>, vector<1x1x64xf32>
      %15 = vector.shape_cast %14 : vector<1x1x64xf32> to vector<1x64xf32>
      %16 = vector.broadcast %15 : vector<1x64xf32> to vector<2x64xf32>
      %17 = arith.addf %13, %16 : vector<2x64xf32>
      %cst_15 = arith.constant 0.000000e+00 : f32
      %18 = vector.broadcast %cst_15 : f32 to vector<2x64xf32>
      %19 = arith.maximumf %17, %18 : vector<2x64xf32>
      %c0_16 = arith.constant 0 : index
      %c0_17 = arith.constant 0 : index
      %c0_18 = arith.constant 0 : index
      %20 = vector.load %arg5[%c0_16, %c0_17, %c0_18] : memref<1x64x53xf32, #tpu.memory_space<vmem>>, vector<1x64x53xf32>
      %21 = vector.shape_cast %20 : vector<1x64x53xf32> to vector<64x53xf32>
      %cst_19 = arith.constant dense<0.000000e+00> : vector<2x53xf32>
      %22 = tpu.matmul %19, %21, %cst_19 {dimension_numbers = #tpu.dot_dimension_numbers<[1], [0], [0], [1], [0, 0, 1, 1], [], []>} : vector<2x64xf32>, vector<64x53xf32>, vector<2x53xf32> -> vector<2x53xf32>
      %c0_20 = arith.constant 0 : index
      %c0_21 = arith.constant 0 : index
      %c0_22 = arith.constant 0 : index
      %23 = vector.load %arg6[%c0_20, %c0_21, %c0_22] : memref<1x2x53xf32, #tpu.memory_space<vmem>>, vector<1x2x53xf32>
      %24 = vector.shape_cast %23 : vector<1x2x53xf32> to vector<2x53xf32>
      %25 = vector.shape_cast %22 : vector<2x53xf32> to vector<1x2x53xf32>
      tpu.vector_store %arg6[%c0_20, %c0_21, %c0_22], %25 {strides = array<i32>} : memref<1x2x53xf32, #tpu.memory_space<vmem>>, vector<1x2x53xf32>,
    } else {
    }
    return
  }
  func.func @transform_0(%arg0: i32, %arg1: i32) -> (i32, i32) {
    %c0_i32 = arith.constant 0 : i32
    %c0_i32_0 = arith.constant 0 : i32
    return %c0_i32, %arg1 : i32, i32
  }
  func.func @transform_1(%arg0: i32, %arg1: i32) -> (i32, i32, i32) {
    %c0_i32 = arith.constant 0 : i32
    %c0_i32_0 = arith.constant 0 : i32
    return %arg0, %arg1, %c0_i32 : i32, i32, i32
  }
  func.func @transform_2(%arg0: i32, %arg1: i32) -> (i32, i32, i32) {
    %c0_i32 = arith.constant 0 : i32
    %c0_i32_0 = arith.constant 0 : i32
    %c0_i32_1 = arith.constant 0 : i32
    return %arg0, %c0_i32, %c0_i32_0 : i32, i32, i32
  }
  func.func @transform_3(%arg0: i32, %arg1: i32) -> (i32, i32, i32) {
    %c0_i32 = arith.constant 0 : i32
    %c0_i32_0 = arith.constant 0 : i32
    %c0_i32_1 = arith.constant 0 : i32
    return %arg0, %c0_i32, %c0_i32_0 : i32, i32, i32
  }
  func.func @transform_4(%arg0: i32, %arg1: i32) -> (i32, i32, i32) {
    %c0_i32 = arith.constant 0 : i32
    %c0_i32_0 = arith.constant 0 : i32
    %c0_i32_1 = arith.constant 0 : i32
    return %arg0, %c0_i32, %c0_i32_0 : i32, i32, i32
  }
}

</mosaic_0001>

<llo_original>
// kernel: simple_card_classifier_forward.3
$region0: #{simple_card_classifier_forward.3}
  #allocation0 [shape = 'u32[]', space=smem, size = 0x4, offset = 0x4, fixed_abs, tag = 'smem constant byte address 0x4 - core index']
  #allocation1 [shape = 'u32[144,128]{1,0:T(1,128)}', space=vmem, size = 0x12000, scoped, tag = 'internal scratch']
  #allocation2 [shape = 'f32[2,64]{1,0:T(2,128)}', space=vmem, size = 0x400, scoped, tag = 'scratch operand']
  %s0 = inlined_call_operand.vmem [shape: bf16[2,1024], index: 0, kind: input, shape index: {}]
  %s1 = inlined_call_operand.vmem [shape: bf16[2,1024,64], index: 1, kind: input, shape index: {}]
  %s2 = inlined_call_operand.vmem [shape: f32[2,1,64], index: 2, kind: input, shape index: {}]
  %s3 = inlined_call_operand.vmem [shape: f32[2,64,53], index: 3, kind: input, shape index: {}]
  %s4 = inlined_call_operand.vmem [shape: f32[2,2,53], index: 4, kind: output, shape index: {}]
  %s5 = sld [smem:[#allocation0]]
  $region57: #{simple_card_classifier_forward.3} parent=0
    _
  %s7 = ssub.s32 1, %s5
  %s8 = scalar_select 0, %s7, %s5
  loop: start=0, step=1, limit=6
  $region2: #{simple_card_classifier_forward.3} parent=0 // loop_pre_header
    _
  $region3: #{simple_card_classifier_forward.3} parent=0 // loop_header
    %s10 = sphi 0, %s14
    %p11 = scmp.ge.s32.totalorder %s10, 6
    %s17 = sphi 0, %s29
    %s18 = sphi 0, %s25
    %s19 = sphi 0, %s17
    %s20 = sphi 0, %s18
    %s21 = sphi 0, %s19
    %s22 = sphi 0, %s20
    %s32 = sphi 0, %s34
    %s35 = sphi 0, %s32
    %s36 = sphi 0, %s35
    %s52 = sphi 0, %s36
    %s60 = sphi 0, %s62
    %s63 = sphi 0, %s60
    %s64 = sphi 0, %s63
    %s80 = sphi 0, %s64
    %s86 = sphi 0, %s88
    %s89 = sphi 0, %s86
    %s90 = sphi 0, %s89
    %s106 = sphi 0, %s90
    %s112 = sphi 0, %s114
    %s115 = sphi 0, %s112
    %s116 = sphi 0, %s115
    %s132 = sphi 0, %s116
    %s138 = sphi 0, %s140
    %s141 = sphi 0, %s138
    %s142 = sphi 0, %s141
    %s158 = sphi 0, %s142
  $region4: #{simple_card_classifier_forward.3} parent=0 // loop_header_branch
    %13 = sbr.rel (%p11) target = $region8
  $region5: #{simple_card_classifier_forward.3} parent=0 // loop_body
    %s15 = ssub.s32 %s10, 1
    %s16 = ssub.s32 %s10, 2
    %s23 = sadd.s32 1, %s18
    %p24 = scmp.ge.s32.totalorder %s23, 2
    %s25 = scalar_select %p24, 0, %s23
    %s26 = sadd.s32 1, %s17
    %s27 = scalar_select %p24, %s26, %s17
    %p28 = scmp.ge.s32.totalorder %s27, 2
    %s29 = scalar_select %p28, 0, %s27
    %s30 = ssub.s32 %s18, %s25
    %p31 = scmp.eq.s32.totalorder %s30, 0
    %s33 = sadd.s32 %s32, 1
    %s34 = scalar_select %p31, %s32, %s33
    %p37 = pneg %p31
    %p38 = scmp.eq.s32.totalorder %s10, 3
    %p39 = por %p37, %p38
    %p40 = scmp.ne.s32.totalorder %s32, %s35
    %p41 = scmp.eq.s32.totalorder %s10, 0
    %p42 = por %p40, %p41
    %p43 = scmp.ne.s32.totalorder %s32, %s35
    %p44 = scmp.eq.s32.totalorder %s15, 3
    %p45 = por %p43, %p44
    %p46 = scmp.ne.s32.totalorder %s35, %s36
    %p47 = scmp.eq.s32.totalorder %s15, 0
    %p48 = por %p46, %p47
    %p49 = scmp.ne.s32.totalorder %s35, %s36
    %p50 = scmp.eq.s32.totalorder %s16, 3
    %p51 = por %p49, %p50
    %p53 = scmp.ne.s32.totalorder %s36, %s52
    %p54 = scmp.eq.s32.totalorder %s16, 0
    %p55 = por %p53, %p54
    %s56 = ssub.s32 %s17, %s29
    %s57 = ssub.s32 %s18, %s25
    %s58 = sor.u32 %s56, %s57
    %p59 = scmp.eq.s32.totalorder %s58, 0
    %s61 = sadd.s32 %s60, 1
    %s62 = scalar_select %p59, %s60, %s61
    %p65 = pneg %p59
    %p66 = scmp.eq.s32.totalorder %s10, 3
    %p67 = por %p65, %p66
    %p68 = scmp.ne.s32.totalorder %s60, %s63
    %p69 = scmp.eq.s32.totalorder %s10, 0
    %p70 = por %p68, %p69
    %p71 = scmp.ne.s32.totalorder %s60, %s63
    %p72 = scmp.eq.s32.totalorder %s15, 3
    %p73 = por %p71, %p72
    %p74 = scmp.ne.s32.totalorder %s63, %s64
    %p75 = scmp.eq.s32.totalorder %s15, 0
    %p76 = por %p74, %p75
    %p77 = scmp.ne.s32.totalorder %s63, %s64
    %p78 = scmp.eq.s32.totalorder %s16, 3
    %p79 = por %p77, %p78
    %p81 = scmp.ne.s32.totalorder %s64, %s80
    %p82 = scmp.eq.s32.totalorder %s16, 0
    %p83 = por %p81, %p82
    %s84 = ssub.s32 %s17, %s29
    %p85 = scmp.eq.s32.totalorder %s84, 0
    %s87 = sadd.s32 %s86, 1
    %s88 = scalar_select %p85, %s86, %s87
    %p91 = pneg %p85
    %p92 = scmp.eq.s32.totalorder %s10, 3
    %p93 = por %p91, %p92
    %p94 = scmp.ne.s32.totalorder %s86, %s89
    %p95 = scmp.eq.s32.totalorder %s10, 0
    %p96 = por %p94, %p95
    %p97 = scmp.ne.s32.totalorder %s86, %s89
    %p98 = scmp.eq.s32.totalorder %s15, 3
    %p99 = por %p97, %p98
    %p100 = scmp.ne.s32.totalorder %s89, %s90
    %p101 = scmp.eq.s32.totalorder %s15, 0
    %p102 = por %p100, %p101
    %p103 = scmp.ne.s32.totalorder %s89, %s90
    %p104 = scmp.eq.s32.totalorder %s16, 3
    %p105 = por %p103, %p104
    %p107 = scmp.ne.s32.totalorder %s90, %s106
    %p108 = scmp.eq.s32.totalorder %s16, 0
    %p109 = por %p107, %p108
    %s110 = ssub.s32 %s17, %s29
    %p111 = scmp.eq.s32.totalorder %s110, 0
    %s113 = sadd.s32 %s112, 1
    %s114 = scalar_select %p111, %s112, %s113
    %p117 = pneg %p111
    %p118 = scmp.eq.s32.totalorder %s10, 3
    %p119 = por %p117, %p118
    %p120 = scmp.ne.s32.totalorder %s112, %s115
    %p121 = scmp.eq.s32.totalorder %s10, 0
    %p122 = por %p120, %p121
    %p123 = scmp.ne.s32.totalorder %s112, %s115
    %p124 = scmp.eq.s32.totalorder %s15, 3
    %p125 = por %p123, %p124
    %p126 = scmp.ne.s32.totalorder %s115, %s116
    %p127 = scmp.eq.s32.totalorder %s15, 0
    %p128 = por %p126, %p127
    %p129 = scmp.ne.s32.totalorder %s115, %s116
    %p130 = scmp.eq.s32.totalorder %s16, 3
    %p131 = por %p129, %p130
    %p133 = scmp.ne.s32.totalorder %s116, %s132
    %p134 = scmp.eq.s32.totalorder %s16, 0
    %p135 = por %p133, %p134
    %s136 = ssub.s32 %s17, %s29
    %p137 = scmp.eq.s32.totalorder %s136, 0
    %s139 = sadd.s32 %s138, 1
    %s140 = scalar_select %p137, %s138, %s139
    %p143 = pneg %p137
    %p144 = scmp.eq.s32.totalorder %s10, 3
    %p145 = por %p143, %p144
    %p146 = scmp.ne.s32.totalorder %s138, %s141
    %p147 = scmp.eq.s32.totalorder %s10, 0
    %p148 = por %p146, %p147
    %p149 = scmp.ne.s32.totalorder %s138, %s141
    %p150 = scmp.eq.s32.totalorder %s15, 3
    %p151 = por %p149, %p150
    %p152 = scmp.ne.s32.totalorder %s141, %s142
    %p153 = scmp.eq.s32.totalorder %s15, 0
    %p154 = por %p152, %p153
    %p155 = scmp.ne.s32.totalorder %s141, %s142
    %p156 = scmp.eq.s32.totalorder %s16, 3
    %p157 = por %p155, %p156
    %p159 = scmp.ne.s32.totalorder %s142, %s158
    %p160 = scmp.eq.s32.totalorder %s16, 0
    %p161 = por %p159, %p160
    %p162 = scmp.le.s32.totalorder 1, %s10
    %p163 = scmp.lt.s32.totalorder %s10, 5
    %p164 = pnand %p162, %p163
    %p165 = pneg %p164
    // Predicated region
    $region9: #{simple_card_classifier_forward.3} parent=5 // pred_check
      _
    $region10: #{simple_card_classifier_forward.3} parent=5 // pred_check_branch
      %167 = sbr.rel (%p164) target = $region12
    $region11: #{simple_card_classifier_forward.3} parent=5 // pred_region
      %s168 = ssub.s32 %s10, 1
    $region12: #{simple_card_classifier_forward.3} parent=5 // pred_fallthru
      _
    %p169 = scmp.lt.s32.totalorder %s10, 4
    // Predicated region
    $region13: #{simple_card_classifier_forward.3} parent=5 // pred_check
      %p170 = pneg %p169
    $region14: #{simple_card_classifier_forward.3} parent=5 // pred_check_branch
      %172 = sbr.rel (%p170) target = $region16
    $region15: #{simple_card_classifier_forward.3} parent=5 // pred_region
      // Predicated region
      $region17: #{simple_card_classifier_forward.3} parent=15 // pred_check
        %p173 = pneg %p42
      $region18: #{simple_card_classifier_forward.3} parent=15 // pred_check_branch
        %175 = sbr.rel (%p173) target = $region20
      $region19: #{simple_card_classifier_forward.3} parent=15 // pred_region
        %s176 = smul.u32 4, %s18
        %p177 = scmp.lt.s32.totalorder %s176, 7
        %s178 = scalar_select %p177, %s176, 7
        %s179 = scalar_lea.vmem %s0, %s178
        %s180 = smul.u32 4, %s18
      $region20: #{simple_card_classifier_forward.3} parent=15 // pred_fallthru
        _
      // Predicated region
      $region21: #{simple_card_classifier_forward.3} parent=15 // pred_check
        %p181 = pneg %p70
      $region22: #{simple_card_classifier_forward.3} parent=15 // pred_check_branch
        %183 = sbr.rel (%p181) target = $region24
      $region23: #{simple_card_classifier_forward.3} parent=15 // pred_region
        %s184 = smul.u32 64, %s18
        %p185 = scmp.lt.s32.totalorder %s17, 1
        %s186 = scalar_select %p185, %s17, 1
        %p187 = scmp.lt.s32.totalorder %s184, 127
        %s188 = scalar_select %p187, %s184, 127
        %s189 = smul.addr %s186, 128
        %s190 = sadd.s32 %s188, %s189
        %s191 = smul.addr %s190, 4
        %s192 = scalar_lea.vmem %s1, %s191
        %s193 = smul.u32 64, %s18
      $region24: #{simple_card_classifier_forward.3} parent=15 // pred_fallthru
        _
      // Predicated region
      $region25: #{simple_card_classifier_forward.3} parent=15 // pred_check
        %p194 = pneg %p96
      $region26: #{simple_card_classifier_forward.3} parent=15 // pred_check_branch
        %196 = sbr.rel (%p194) target = $region28
      $region27: #{simple_card_classifier_forward.3} parent=15 // pred_region
        %p197 = scmp.lt.s32.totalorder %s17, 1
        %s198 = scalar_select %p197, %s17, 1
        %s199 = scalar_lea.vmem %s2, %s198
      $region28: #{simple_card_classifier_forward.3} parent=15 // pred_fallthru
        _
      // Predicated region
      $region29: #{simple_card_classifier_forward.3} parent=15 // pred_check
        %p200 = pneg %p122
      $region30: #{simple_card_classifier_forward.3} parent=15 // pred_check_branch
        %202 = sbr.rel (%p200) target = $region32
      $region31: #{simple_card_classifier_forward.3} parent=15 // pred_region
        %p203 = scmp.lt.s32.totalorder %s17, 1
        %s204 = scalar_select %p203, %s17, 1
        %s205 = smul.addr %s204, 8
        %s206 = smul.addr %s205, 8
        %s207 = scalar_lea.vmem %s3, %s206
      $region32: #{simple_card_classifier_forward.3} parent=15 // pred_fallthru
        _
    $region16: #{simple_card_classifier_forward.3} parent=5 // pred_fallthru
      _
    %p208 = scmp.le.s32.totalorder 1, %s10
    %p209 = scmp.lt.s32.totalorder %s10, 5
    %p210 = pnand %p208, %p209
    %p211 = pneg %p210
    // Predicated region
    $region33: #{simple_card_classifier_forward.3} parent=5 // pred_check
      _
    $region34: #{simple_card_classifier_forward.3} parent=5 // pred_check_branch
      %213 = sbr.rel (%p210) target = $region36
    $region35: #{simple_card_classifier_forward.3} parent=5 // pred_region
      %s214 = ssub.s32 %s10, 1
      %s215 = smul.u32 4, %s20
      %p216 = scmp.lt.s32.totalorder %s215, 7
      %s217 = scalar_select %p216, %s215, 7
      %s218 = scalar_lea.vmem %s0, %s217
      %p219 = pneg %p48
      %p220 = pneg %p45
      %s221 = smul.u32 64, %s20
      %p222 = scmp.lt.s32.totalorder %s19, 1
      %s223 = scalar_select %p222, %s19, 1
      %p224 = scmp.lt.s32.totalorder %s221, 127
      %s225 = scalar_select %p224, %s221, 127
      %s226 = smul.addr %s223, 128
      %s227 = sadd.s32 %s225, %s226
      %s228 = smul.addr %s227, 4
      %s229 = scalar_lea.vmem %s1, %s228
      %p230 = pneg %p76
      %p231 = pneg %p73
      %p232 = scmp.lt.s32.totalorder %s19, 1
      %s233 = scalar_select %p232, %s19, 1
      %s234 = scalar_lea.vmem %s2, %s233
      %p235 = pneg %p102
      %p236 = pneg %p99
      %p237 = scmp.lt.s32.totalorder %s19, 1
      %s238 = scalar_select %p237, %s19, 1
      %s239 = smul.addr %s238, 8
      %s240 = smul.addr %s239, 8
      %s241 = scalar_lea.vmem %s3, %s240
      %p242 = pneg %p128
      %p243 = pneg %p125
      %p244 = pneg %p154
      %p245 = pneg %p151
      %p246 = scmp.lt.s32.totalorder %s19, 1
      %s247 = scalar_select %p246, %s19, 1
      %s248 = smul.addr %s247, 2
      %s249 = scalar_lea.vmem %s4, %s248
      %s250 = smul.u32 4, %s20
      %p251 = scmp.lt.s32.totalorder %s250, 7
      %s252 = scalar_select %p251, %s250, 7
      %s253 = scalar_lea.vmem %s0, %s252
      %s254 = smul.u32 4, %s20
      %s255 = smul.u32 64, %s20
      %p256 = scmp.lt.s32.totalorder %s19, 1
      %s257 = scalar_select %p256, %s19, 1
      %p258 = scmp.lt.s32.totalorder %s255, 127
      %s259 = scalar_select %p258, %s255, 127
      %s260 = smul.addr %s257, 128
      %s261 = sadd.s32 %s259, %s260
      %s262 = smul.addr %s261, 4
      %s263 = scalar_lea.vmem %s1, %s262
      %s264 = smul.u32 64, %s20
      %p265 = scmp.lt.s32.totalorder %s19, 1
      %s266 = scalar_select %p265, %s19, 1
      %s267 = scalar_lea.vmem %s2, %s266
      %p268 = scmp.lt.s32.totalorder %s19, 1
      %s269 = scalar_select %p268, %s19, 1
      %s270 = smul.addr %s269, 8
      %s271 = smul.addr %s270, 8
      %s272 = scalar_lea.vmem %s3, %s271
      %p273 = scmp.lt.s32.totalorder %s19, 1
      %s274 = scalar_select %p273, %s19, 1
      %s275 = smul.addr %s274, 2
      %s276 = scalar_lea.vmem %s4, %s275
      %p278 = scmp.eq.s32.totalorder %s20, 0
      // Predicated region
      $region37: #{simple_card_classifier_forward.3} parent=35 // pred_check
        %p279 = pneg %p278
      $region38: #{simple_card_classifier_forward.3} parent=35 // pred_check_branch
        %281 = sbr.rel (%p279) target = $region40
      $region39: #{simple_card_classifier_forward.3} parent=35 // pred_region
        %vm282 = vcmask 517120
        %283 = vst.msk [vmem:[#allocation2] sm:$0x3] %vm282, 0.0
      $region40: #{simple_card_classifier_forward.3} parent=35 // pred_fallthru
        _
      %v284 = vld [vmem:[#allocation2] sm:$0x3]
      %v285 = vld [vmem:[%s253] sm:$0xf]
      %v286 = vld [vmem:[%s263] sm:$0xf]
      %v287 = vld [vmem:[%s263 + $0x4] sm:$0xf]
      %v288 = vld [vmem:[%s263 + $0x8] sm:$0xf]
      %v289 = vld [vmem:[%s263 + $0xc] sm:$0xf]
      %v290 = vld [vmem:[%s263 + $0x10] sm:$0xf]
      %v291 = vld [vmem:[%s263 + $0x14] sm:$0xf]
      %v292 = vld [vmem:[%s263 + $0x18] sm:$0xf]
      %v293 = vld [vmem:[%s263 + $0x1c] sm:$0xf]
      %v294 = vld [vmem:[%s263 + $0x20] sm:$0xf]
      %v295 = vld [vmem:[%s263 + $0x24] sm:$0xf]
      %v296 = vld [vmem:[%s263 + $0x28] sm:$0xf]
      %v297 = vld [vmem:[%s263 + $0x2c] sm:$0xf]
      %v298 = vld [vmem:[%s263 + $0x30] sm:$0xf]
      %v299 = vld [vmem:[%s263 + $0x34] sm:$0xf]
      %v300 = vld [vmem:[%s263 + $0x38] sm:$0xf]
      %v301 = vld [vmem:[%s263 + $0x3c] sm:$0xf]
      %v302 = vld [vmem:[%s263 + $0x40] sm:$0xf]
      %v303 = vld [vmem:[%s263 + $0x44] sm:$0xf]
      %v304 = vld [vmem:[%s263 + $0x48] sm:$0xf]
      %v305 = vld [vmem:[%s263 + $0x4c] sm:$0xf]
      %v306 = vld [vmem:[%s263 + $0x50] sm:$0xf]
      %v307 = vld [vmem:[%s263 + $0x54] sm:$0xf]
      %v308 = vld [vmem:[%s263 + $0x58] sm:$0xf]
      %v309 = vld [vmem:[%s263 + $0x5c] sm:$0xf]
      %v310 = vld [vmem:[%s263 + $0x60] sm:$0xf]
      %v311 = vld [vmem:[%s263 + $0x64] sm:$0xf]
      %v312 = vld [vmem:[%s263 + $0x68] sm:$0xf]
      %v313 = vld [vmem:[%s263 + $0x6c] sm:$0xf]
      %v314 = vld [vmem:[%s263 + $0x70] sm:$0xf]
      %v315 = vld [vmem:[%s263 + $0x74] sm:$0xf]
      %v316 = vld [vmem:[%s263 + $0x78] sm:$0xf]
      %v317 = vld [vmem:[%s263 + $0x7c] sm:$0xf]
      %v318 = vld [vmem:[%s263 + $0x80] sm:$0xf]
      %v319 = vld [vmem:[%s263 + $0x84] sm:$0xf]
      %v320 = vld [vmem:[%s263 + $0x88] sm:$0xf]
      %v321 = vld [vmem:[%s263 + $0x8c] sm:$0xf]
      %v322 = vld [vmem:[%s263 + $0x90] sm:$0xf]
      %v323 = vld [vmem:[%s263 + $0x94] sm:$0xf]
      %v324 = vld [vmem:[%s263 + $0x98] sm:$0xf]
      %v325 = vld [vmem:[%s263 + $0x9c] sm:$0xf]
      %v326 = vld [vmem:[%s263 + $0xa0] sm:$0xf]
      %v327 = vld [vmem:[%s263 + $0xa4] sm:$0xf]
      %v328 = vld [vmem:[%s263 + $0xa8] sm:$0xf]
      %v329 = vld [vmem:[%s263 + $0xac] sm:$0xf]
      %v330 = vld [vmem:[%s263 + $0xb0] sm:$0xf]
      %v331 = vld [vmem:[%s263 + $0xb4] sm:$0xf]
      %v332 = vld [vmem:[%s263 + $0xb8] sm:$0xf]
      %v333 = vld [vmem:[%s263 + $0xbc] sm:$0xf]
      %v334 = vld [vmem:[%s263 + $0xc0] sm:$0xf]
      %v335 = vld [vmem:[%s263 + $0xc4] sm:$0xf]
      %v336 = vld [vmem:[%s263 + $0xc8] sm:$0xf]
      %v337 = vld [vmem:[%s263 + $0xcc] sm:$0xf]
      %v338 = vld [vmem:[%s263 + $0xd0] sm:$0xf]
      %v339 = vld [vmem:[%s263 + $0xd4] sm:$0xf]
      %v340 = vld [vmem:[%s263 + $0xd8] sm:$0xf]
      %v341 = vld [vmem:[%s263 + $0xdc] sm:$0xf]
      %v342 = vld [vmem:[%s263 + $0xe0] sm:$0xf]
      %v343 = vld [vmem:[%s263 + $0xe4] sm:$0xf]
      %v344 = vld [vmem:[%s263 + $0xe8] sm:$0xf]
      %v345 = vld [vmem:[%s263 + $0xec] sm:$0xf]
      %v346 = vld [vmem:[%s263 + $0xf0] sm:$0xf]
      %v347 = vld [vmem:[%s263 + $0xf4] sm:$0xf]
      %v348 = vld [vmem:[%s263 + $0xf8] sm:$0xf]
      %v349 = vld [vmem:[%s263 + $0xfc] sm:$0xf]
      %v352 = vunpack.c.l.s4 1966171168
      %v353 = vunpack.c.0.s8 %v352
      %v354 = vlaneseq
      %v355 = vshrl.u32 %v354, 7
      %v356 = vsub.s32 %v353, %v355
      %v357 = vrot.slane %v285, %v356
      %v358 = vcombine.high %v357, %v357
      %v360 = vunpack.c.l.s4 1966171168
      %v361 = vunpack.c.0.s8 %v360
      %v362 = vlaneseq
      %v363 = vshrl.u32 %v362, 7
      %v364 = vsub.s32 %v361, %v363
      %v365 = vrot.slane %v357, %v364
      %v367 = vunpack.c.l.s4 1966171168
      %v368 = vunpack.c.0.s8 %v367
      %v369 = vlaneseq
      %v370 = vshrl.u32 %v369, 7
      %v371 = vsub.s32 %v368, %v370
      %v372 = vrot.slane %v358, %v371
      %v373 = vcombine.high %v365, %v365
      %v374 = vcombine.high %v372, %v372
      %v443 = vunpack.c.l.b16 %v286
      %v444 = vunpack.c.l.b16 %v287
      %v445 = vunpack.c.l.b16 %v288
      %v446 = vunpack.c.l.b16 %v289
      %v447 = vunpack.c.l.b16 %v290
      %v448 = vunpack.c.l.b16 %v291
      %v449 = vunpack.c.l.b16 %v292
      %v450 = vunpack.c.l.b16 %v293
      %v451 = vunpack.c.l.b16 %v294
      %v452 = vunpack.c.l.b16 %v295
      %v453 = vunpack.c.l.b16 %v296
      %v454 = vunpack.c.l.b16 %v297
      %v455 = vunpack.c.l.b16 %v298
      %v456 = vunpack.c.l.b16 %v299
      %v457 = vunpack.c.l.b16 %v300
      %v458 = vunpack.c.l.b16 %v301
      %v459 = vunpack.c.l.b16 %v302
      %v460 = vunpack.c.l.b16 %v303
      %v461 = vunpack.c.l.b16 %v304
      %v462 = vunpack.c.l.b16 %v305
      %v463 = vunpack.c.l.b16 %v306
      %v464 = vunpack.c.l.b16 %v307
      %v465 = vunpack.c.l.b16 %v308
      %v466 = vunpack.c.l.b16 %v309
      %v467 = vunpack.c.l.b16 %v310
      %v468 = vunpack.c.l.b16 %v311
      %v469 = vunpack.c.l.b16 %v312
      %v470 = vunpack.c.l.b16 %v313
      %v471 = vunpack.c.l.b16 %v314
      %v472 = vunpack.c.l.b16 %v315
      %v473 = vunpack.c.l.b16 %v316
      %v474 = vunpack.c.l.b16 %v317
      %v475 = vunpack.c.l.b16 %v318
      %v476 = vunpack.c.l.b16 %v319
      %v477 = vunpack.c.l.b16 %v320
      %v478 = vunpack.c.l.b16 %v321
      %v479 = vunpack.c.l.b16 %v322
      %v480 = vunpack.c.l.b16 %v323
      %v481 = vunpack.c.l.b16 %v324
      %v482 = vunpack.c.l.b16 %v325
      %v483 = vunpack.c.l.b16 %v326
      %v484 = vunpack.c.l.b16 %v327
      %v485 = vunpack.c.l.b16 %v328
      %v486 = vunpack.c.l.b16 %v329
      %v487 = vunpack.c.l.b16 %v330
      %v488 = vunpack.c.l.b16 %v331
      %v489 = vunpack.c.l.b16 %v332
      %v490 = vunpack.c.l.b16 %v333
      %v491 = vunpack.c.l.b16 %v334
      %v492 = vunpack.c.l.b16 %v335
      %v493 = vunpack.c.l.b16 %v336
      %v494 = vunpack.c.l.b16 %v337
      %v495 = vunpack.c.l.b16 %v338
      %v496 = vunpack.c.l.b16 %v339
      %v497 = vunpack.c.l.b16 %v340
      %v498 = vunpack.c.l.b16 %v341
      %v499 = vunpack.c.l.b16 %v342
      %v500 = vunpack.c.l.b16 %v343
      %v501 = vunpack.c.l.b16 %v344
      %v502 = vunpack.c.l.b16 %v345
      %v503 = vunpack.c.l.b16 %v346
      %v504 = vunpack.c.l.b16 %v347
      %v505 = vunpack.c.l.b16 %v348
      %v506 = vunpack.c.l.b16 %v349
      %v507 = vpack.c.b16 %v444, %v443
      %v508 = vpack.c.b16 %v446, %v445
      %v509 = vpack.c.b16 %v448, %v447
      %v510 = vpack.c.b16 %v450, %v449
      %v511 = vpack.c.b16 %v452, %v451
      %v512 = vpack.c.b16 %v454, %v453
      %v513 = vpack.c.b16 %v456, %v455
      %v514 = vpack.c.b16 %v458, %v457
      %v515 = vpack.c.b16 %v460, %v459
      %v516 = vpack.c.b16 %v462, %v461
      %v517 = vpack.c.b16 %v464, %v463
      %v518 = vpack.c.b16 %v466, %v465
      %v519 = vpack.c.b16 %v468, %v467
      %v520 = vpack.c.b16 %v470, %v469
      %v521 = vpack.c.b16 %v472, %v471
      %v522 = vpack.c.b16 %v474, %v473
      %v523 = vpack.c.b16 %v476, %v475
      %v524 = vpack.c.b16 %v478, %v477
      %v525 = vpack.c.b16 %v480, %v479
      %v526 = vpack.c.b16 %v482, %v481
      %v527 = vpack.c.b16 %v484, %v483
      %v528 = vpack.c.b16 %v486, %v485
      %v529 = vpack.c.b16 %v488, %v487
      %v530 = vpack.c.b16 %v490, %v489
      %v531 = vpack.c.b16 %v492, %v491
      %v532 = vpack.c.b16 %v494, %v493
      %v533 = vpack.c.b16 %v496, %v495
      %v534 = vpack.c.b16 %v498, %v497
      %v535 = vpack.c.b16 %v500, %v499
      %v536 = vpack.c.b16 %v502, %v501
      %v537 = vpack.c.b16 %v504, %v503
      %v538 = vpack.c.b16 %v506, %v505
      %571 = vmatprep.subr.bf16.mxu0 0
      %572 = vmatpush1.bf16.msra.mxu0 %v507
      %573 = vmatprep.subr.bf16.mxu0 0
      %574 = vmatpush1.bf16.msra.mxu0 %v508
      %575 = vmatprep.subr.bf16.mxu0 0
      %576 = vmatpush1.bf16.msra.mxu0 %v509
      %577 = vmatprep.subr.bf16.mxu0 0
      %578 = vmatpush1.bf16.msra.mxu0 %v510
      %579 = vmatprep.subr.bf16.mxu0 0
      %580 = vmatpush1.bf16.msra.mxu0 %v511
      %581 = vmatprep.subr.bf16.mxu0 0
      %582 = vmatpush1.bf16.msra.mxu0 %v512
      %583 = vmatprep.subr.bf16.mxu0 0
      %584 = vmatpush1.bf16.msra.mxu0 %v513
      %585 = vmatprep.subr.bf16.mxu0 0
      %586 = vmatpush1.bf16.msra.mxu0 %v514
      %587 = vmatprep.subr.bf16.mxu0 0
      %588 = vmatpush1.bf16.msra.mxu0 %v515
      %589 = vmatprep.subr.bf16.mxu0 0
      %590 = vmatpush1.bf16.msra.mxu0 %v516
      %591 = vmatprep.subr.bf16.mxu0 0
      %592 = vmatpush1.bf16.msra.mxu0 %v517
      %593 = vmatprep.subr.bf16.mxu0 0
      %594 = vmatpush1.bf16.msra.mxu0 %v518
      %595 = vmatprep.subr.bf16.mxu0 0
      %596 = vmatpush1.bf16.msra.mxu0 %v519
      %597 = vmatprep.subr.bf16.mxu0 0
      %598 = vmatpush1.bf16.msra.mxu0 %v520
      %599 = vmatprep.subr.bf16.mxu0 0
      %600 = vmatpush1.bf16.msra.mxu0 %v521
      %601 = vmatprep.subr.bf16.mxu0 0
      %602 = vmatpush1.bf16.msra.mxu0 %v522
      %603 = vmatprep.mubr.bf16.mxu0 %v372
      %604 = vmatmul.mubr.bf16.gmra.mrb[0].mxu0 %v365
      %v605 = vpop.f32.mrb[0].mxu0
      %v606 = vadd.f32 0.0, %v605
      %v607 = vpop.f32.mrb[0].mxu0
      %v608 = vpop.f32.mrb[0].mxu0
      %v609 = vpop.f32.mrb[0].mxu0
      %610 = vdwg.mxu0
      %611 = vmatprep.subr.bf16.mxu0 0
      %612 = vmatpush1.bf16.msra.mxu0 %v523
      %613 = vmatprep.subr.bf16.mxu0 0
      %614 = vmatpush1.bf16.msra.mxu0 %v524
      %615 = vmatprep.subr.bf16.mxu0 0
      %616 = vmatpush1.bf16.msra.mxu0 %v525
      %617 = vmatprep.subr.bf16.mxu0 0
      %618 = vmatpush1.bf16.msra.mxu0 %v526
      %619 = vmatprep.subr.bf16.mxu0 0
      %620 = vmatpush1.bf16.msra.mxu0 %v527
      %621 = vmatprep.subr.bf16.mxu0 0
      %622 = vmatpush1.bf16.msra.mxu0 %v528
      %623 = vmatprep.subr.bf16.mxu0 0
      %624 = vmatpush1.bf16.msra.mxu0 %v529
      %625 = vmatprep.subr.bf16.mxu0 0
      %626 = vmatpush1.bf16.msra.mxu0 %v530
      %627 = vmatprep.subr.bf16.mxu0 0
      %628 = vmatpush1.bf16.msra.mxu0 %v531
      %629 = vmatprep.subr.bf16.mxu0 0
      %630 = vmatpush1.bf16.msra.mxu0 %v532
      %631 = vmatprep.subr.bf16.mxu0 0
      %632 = vmatpush1.bf16.msra.mxu0 %v533
      %633 = vmatprep.subr.bf16.mxu0 0
      %634 = vmatpush1.bf16.msra.mxu0 %v534
      %635 = vmatprep.subr.bf16.mxu0 0
      %636 = vmatpush1.bf16.msra.mxu0 %v535
      %637 = vmatprep.subr.bf16.mxu0 0
      %638 = vmatpush1.bf16.msra.mxu0 %v536
      %639 = vmatprep.subr.bf16.mxu0 0
      %640 = vmatpush1.bf16.msra.mxu0 %v537
      %641 = vmatprep.subr.bf16.mxu0 0
      %642 = vmatpush1.bf16.msra.mxu0 %v538
      %643 = vmatprep.mubr.bf16.mxu0 %v374
      %644 = vmatmul.mubr.bf16.gmra.mrb[0].mxu0 %v373
      %v645 = vpop.f32.mrb[0].mxu0
      %v646 = vadd.f32 %v606, %v645
      %v647 = vpop.f32.mrb[0].mxu0
      %v648 = vpop.f32.mrb[0].mxu0
      %v649 = vpop.f32.mrb[0].mxu0
      %650 = vdwg.mxu0
      %v651 = vadd.f32 %v284, %v646
      %vm652 = vcmask 517120
      %653 = vst.msk [vmem:[#allocation2] sm:$0x3] %vm652, %v651
      %p654 = scmp.eq.s32.totalorder %s20, 1
      // Predicated region
      $region41: #{simple_card_classifier_forward.3} parent=35 // pred_check
        %p655 = pneg %p654
      $region42: #{simple_card_classifier_forward.3} parent=35 // pred_check_branch
        %657 = sbr.rel (%p655) target = $region44
      $region43: #{simple_card_classifier_forward.3} parent=35 // pred_region
        %v658 = vld [vmem:[#allocation2] sm:$0x3]
        %v659 = vld [vmem:[%s267] sm:$0x1]
        %v661 = vlaneseq
        %v662 = vshrl.u32 %v661, 7
        %v663 = vsub.s32 0, %v662
        %v664 = vrot.slane %v659, %v663
        %v666 = vadd.f32 %v658, %v664
        %v667 = vmax.f32 %v666, 0.0
        %v668 = vld [vmem:[%s272] sm:$0xff]
        %v669 = vld [vmem:[%s272 + $0x8] sm:$0xff]
        %v670 = vld [vmem:[%s272 + $0x10] sm:$0xff]
        %v671 = vld [vmem:[%s272 + $0x18] sm:$0xff]
        %v672 = vld [vmem:[%s272 + $0x20] sm:$0xff]
        %v673 = vld [vmem:[%s272 + $0x28] sm:$0xff]
        %v674 = vld [vmem:[%s272 + $0x30] sm:$0xff]
        %v675 = vld [vmem:[%s272 + $0x38] sm:$0xff]
        %vm676 = vcmask 523264
        %v678 = vsel %vm676, %v667, 0
        %680 = vmatprep.subr.mxu0 0.0
        %681 = vmatpush1.msra.mxu0 %v668
        %682 = vmatprep.subr.mxu0 0.0
        %683 = vmatpush1.msra.mxu0 %v669
        %684 = vmatprep.subr.mxu0 0.0
        %685 = vmatpush1.msra.mxu0 %v670
        %686 = vmatprep.subr.mxu0 0.0
        %687 = vmatpush1.msra.mxu0 %v671
        %688 = vmatprep.subr.mxu0 0.0
        %689 = vmatpush1.msra.mxu0 %v672
        %690 = vmatprep.subr.mxu0 0.0
        %691 = vmatpush1.msra.mxu0 %v673
        %692 = vmatprep.subr.mxu0 0.0
        %693 = vmatpush1.msra.mxu0 %v674
        %694 = vmatprep.subr.mxu0 0.0
        %695 = vmatpush1.msra.mxu0 %v675
        %696 = vmatprep.subr.mxu0 0.0
        %697 = vmatpush1.msra.mxu0 0.0
        %698 = vmatprep.subr.mxu0 0.0
        %699 = vmatpush1.msra.mxu0 0.0
        %700 = vmatprep.subr.mxu0 0.0
        %701 = vmatpush1.msra.mxu0 0.0
        %702 = vmatprep.subr.mxu0 0.0
        %703 = vmatpush1.msra.mxu0 0.0
        %704 = vmatprep.subr.mxu0 0.0
        %705 = vmatpush1.msra.mxu0 0.0
        %706 = vmatprep.subr.mxu0 0.0
        %707 = vmatpush1.msra.mxu0 0.0
        %708 = vmatprep.subr.mxu0 0.0
        %709 = vmatpush1.msra.mxu0 0.0
        %710 = vmatprep.subr.mxu0 0.0
        %711 = vmatpush1.msra.mxu0 0.0
        %712 = vmatprep.subr.mxu0 0.0
        %713 = vmatpush1.msra.mxu0 0.0
        %714 = vmatprep.subr.mxu0 0.0
        %715 = vmatpush1.msra.mxu0 0.0
        %716 = vmatprep.subr.mxu0 0.0
        %717 = vmatpush1.msra.mxu0 0.0
        %718 = vmatprep.subr.mxu0 0.0
        %719 = vmatpush1.msra.mxu0 0.0
        %720 = vmatprep.subr.mxu0 0.0
        %721 = vmatpush1.msra.mxu0 0.0
        %722 = vmatprep.subr.mxu0 0.0
        %723 = vmatpush1.msra.mxu0 0.0
        %724 = vmatprep.subr.mxu0 0.0
        %725 = vmatpush1.msra.mxu0 0.0
        %726 = vmatprep.subr.mxu0 0.0
        %727 = vmatpush1.msra.mxu0 0.0
        %728 = vmatprep.subr.mxu0 0.0
        %729 = vmatpush1.msra.mxu0 0.0
        %730 = vmatprep.subr.mxu0 0.0
        %731 = vmatpush1.msra.mxu0 0.0
        %732 = vmatprep.subr.mxu0 0.0
        %733 = vmatpush1.msra.mxu0 0.0
        %734 = vmatprep.subr.mxu0 0.0
        %735 = vmatpush1.msra.mxu0 0.0
        %736 = vmatprep.subr.mxu0 0.0
        %737 = vmatpush1.msra.mxu0 0.0
        %738 = vmatprep.subr.mxu0 0.0
        %739 = vmatpush1.msra.mxu0 0.0
        %740 = vmatprep.subr.mxu0 0.0
        %741 = vmatpush1.msra.mxu0 0.0
        %742 = vmatprep.subr.mxu0 0.0
        %743 = vmatpush1.msra.mxu0 0.0
        %744 = vmatprep.mubr.f32.mxu0 0.0
        %745 = vmatmul.mubr.f32.gmra.mrb[0].mxu0 %v678
        %v746 = vpop.f32.mrb[0].mxu0
        %v747 = vadd.f32 0.0, %v746
        %v748 = vpop.f32.mrb[0].mxu0
        %749 = vdwg.mxu0
        %vm750 = vcmask 427008
        %751 = vst.msk [vmem:[%s276] sm:$0x3] %vm750, %v747
      $region44: #{simple_card_classifier_forward.3} parent=35 // pred_fallthru
        _
      %p752 = scmp.lt.s32.totalorder %s19, 1
      %s753 = scalar_select %p752, %s19, 1
      %s754 = smul.addr %s753, 2
      %s755 = scalar_lea.vmem %s4, %s754
      // Predicated region
      $region45: #{simple_card_classifier_forward.3} parent=35 // pred_check
        %p756 = pneg %p151
      $region46: #{simple_card_classifier_forward.3} parent=35 // pred_check_branch
        %758 = sbr.rel (%p756) target = $region48
      $region47: #{simple_card_classifier_forward.3} parent=35 // pred_region
        _
      $region48: #{simple_card_classifier_forward.3} parent=35 // pred_fallthru
        _
    $region36: #{simple_card_classifier_forward.3} parent=5 // pred_fallthru
      _
    %p759 = scmp.le.s32.totalorder 2, %s10
    // Predicated region
    $region49: #{simple_card_classifier_forward.3} parent=5 // pred_check
      %p760 = pneg %p759
    $region50: #{simple_card_classifier_forward.3} parent=5 // pred_check_branch
      %762 = sbr.rel (%p760) target = $region52
    $region51: #{simple_card_classifier_forward.3} parent=5 // pred_region
      %s763 = ssub.s32 %s10, 2
      // Predicated region
      $region53: #{simple_card_classifier_forward.3} parent=51 // pred_check
        %p764 = pneg %p157
      $region54: #{simple_card_classifier_forward.3} parent=51 // pred_check_branch
        %766 = sbr.rel (%p764) target = $region56
      $region55: #{simple_card_classifier_forward.3} parent=51 // pred_region
        %p767 = scmp.lt.s32.totalorder %s21, 1
        %s768 = scalar_select %p767, %s21, 1
        %s769 = smul.addr %s768, 2
        %s770 = scalar_lea.vmem %s4, %s769
      $region56: #{simple_card_classifier_forward.3} parent=51 // pred_fallthru
        _
    $region52: #{simple_card_classifier_forward.3} parent=5 // pred_fallthru
      _
  $region6: #{simple_card_classifier_forward.3} parent=0 // loop_footer
    %s14 = sadd.s32 1, %s10
  $region7: #{simple_card_classifier_forward.3} parent=0 // loop_footer_branch
    %9 = sbr.rel target = $region3
  $region8: #{simple_card_classifier_forward.3} parent=0 // loop_exit
    _

// kernel: simple_card_classifier_forward.2
$region0: #{simple_card_classifier_forward.2}
  #allocation0 [shape = 'u32[]', space=smem, size = 0x4, offset = 0x4, fixed_abs, tag = 'smem constant byte address 0x4 - core index']
  #allocation1 [shape = 'u32[144,128]{1,0:T(1,128)}', space=vmem, size = 0x12000, scoped, tag = 'internal scratch']
  %s0 = inlined_call_operand.vmem [shape: f32[2,3,18,18], index: 0, kind: input, shape index: {}]
  %s1 = inlined_call_operand.vmem [shape: f32[48,9], index: 1, kind: input, shape index: {}]
  %s2 = inlined_call_operand.vmem [shape: f32[16,1], index: 2, kind: input, shape index: {}]
  %s3 = inlined_call_operand.vmem [shape: f32[15,8], index: 3, kind: input, shape index: {}]
  %s4 = inlined_call_operand.vmem [shape: bf16[2,8,16,8], index: 4, kind: output, shape index: {}]
  %s5 = sld [smem:[#allocation0]]
  $region56: #{simple_card_classifier_forward.2} parent=0
    _
  %s7 = ssub.s32 1, %s5
  %s8 = scalar_select 0, %s7, %s5
  loop: start=0, step=1, limit=4
  $region2: #{simple_card_classifier_forward.2} parent=0 // loop_pre_header
    _
  $region3: #{simple_card_classifier_forward.2} parent=0 // loop_header
    %s10 = sphi 0, %s14
    %p11 = scmp.ge.s32.totalorder %s10, 4
    %s20 = sphi 0, %s22
    %s23 = sphi 0, %s20
    %s24 = sphi 0, %s23
    %s40 = sphi 0, %s24
    %s44 = sphi 0, %s44
    %s46 = sphi 0, %s44
    %s47 = sphi 0, %s46
    %s61 = sphi 0, %s47
    %s65 = sphi 0, %s65
    %s67 = sphi 0, %s65
    %s68 = sphi 0, %s67
    %s82 = sphi 0, %s68
    %s86 = sphi 0, %s86
    %s88 = sphi 0, %s86
    %s89 = sphi 0, %s88
    %s103 = sphi 0, %s89
    %s109 = sphi 0, %s111
    %s112 = sphi 0, %s109
    %s113 = sphi 0, %s112
    %s129 = sphi 0, %s113
  $region4: #{simple_card_classifier_forward.2} parent=0 // loop_header_branch
    %13 = sbr.rel (%p11) target = $region8
  $region5: #{simple_card_classifier_forward.2} parent=0 // loop_body
    %s15 = ssub.s32 %s10, 1
    %s16 = ssub.s32 %s10, 2
    %s17 = sadd.s32 %s10, 1
    %s18 = ssub.s32 %s10, %s17
    %p19 = scmp.eq.s32.totalorder %s18, 0
    %s21 = sadd.s32 %s20, 1
    %s22 = scalar_select %p19, %s20, %s21
    %p25 = pneg %p19
    %p26 = scmp.eq.s32.totalorder %s10, 1
    %p27 = por %p25, %p26
    %p28 = scmp.ne.s32.totalorder %s20, %s23
    %p29 = scmp.eq.s32.totalorder %s10, 0
    %p30 = por %p28, %p29
    %p31 = scmp.ne.s32.totalorder %s20, %s23
    %p32 = scmp.eq.s32.totalorder %s15, 1
    %p33 = por %p31, %p32
    %p34 = scmp.ne.s32.totalorder %s23, %s24
    %p35 = scmp.eq.s32.totalorder %s15, 0
    %p36 = por %p34, %p35
    %p37 = scmp.ne.s32.totalorder %s23, %s24
    %p38 = scmp.eq.s32.totalorder %s16, 1
    %p39 = por %p37, %p38
    %p41 = scmp.ne.s32.totalorder %s24, %s40
    %p42 = scmp.eq.s32.totalorder %s16, 0
    %p43 = por %p41, %p42
    %s45 = sadd.s32 %s44, 1
    %p48 = scmp.eq.s32.totalorder %s10, 1
    %p49 = scmp.ne.s32.totalorder %s44, %s46
    %p50 = scmp.eq.s32.totalorder %s10, 0
    %p51 = por %p49, %p50
    %p52 = scmp.ne.s32.totalorder %s44, %s46
    %p53 = scmp.eq.s32.totalorder %s15, 1
    %p54 = por %p52, %p53
    %p55 = scmp.ne.s32.totalorder %s46, %s47
    %p56 = scmp.eq.s32.totalorder %s15, 0
    %p57 = por %p55, %p56
    %p58 = scmp.ne.s32.totalorder %s46, %s47
    %p59 = scmp.eq.s32.totalorder %s16, 1
    %p60 = por %p58, %p59
    %p62 = scmp.ne.s32.totalorder %s47, %s61
    %p63 = scmp.eq.s32.totalorder %s16, 0
    %p64 = por %p62, %p63
    %s66 = sadd.s32 %s65, 1
    %p69 = scmp.eq.s32.totalorder %s10, 1
    %p70 = scmp.ne.s32.totalorder %s65, %s67
    %p71 = scmp.eq.s32.totalorder %s10, 0
    %p72 = por %p70, %p71
    %p73 = scmp.ne.s32.totalorder %s65, %s67
    %p74 = scmp.eq.s32.totalorder %s15, 1
    %p75 = por %p73, %p74
    %p76 = scmp.ne.s32.totalorder %s67, %s68
    %p77 = scmp.eq.s32.totalorder %s15, 0
    %p78 = por %p76, %p77
    %p79 = scmp.ne.s32.totalorder %s67, %s68
    %p80 = scmp.eq.s32.totalorder %s16, 1
    %p81 = por %p79, %p80
    %p83 = scmp.ne.s32.totalorder %s68, %s82
    %p84 = scmp.eq.s32.totalorder %s16, 0
    %p85 = por %p83, %p84
    %s87 = sadd.s32 %s86, 1
    %p90 = scmp.eq.s32.totalorder %s10, 1
    %p91 = scmp.ne.s32.totalorder %s86, %s88
    %p92 = scmp.eq.s32.totalorder %s10, 0
    %p93 = por %p91, %p92
    %p94 = scmp.ne.s32.totalorder %s86, %s88
    %p95 = scmp.eq.s32.totalorder %s15, 1
    %p96 = por %p94, %p95
    %p97 = scmp.ne.s32.totalorder %s88, %s89
    %p98 = scmp.eq.s32.totalorder %s15, 0
    %p99 = por %p97, %p98
    %p100 = scmp.ne.s32.totalorder %s88, %s89
    %p101 = scmp.eq.s32.totalorder %s16, 1
    %p102 = por %p100, %p101
    %p104 = scmp.ne.s32.totalorder %s89, %s103
    %p105 = scmp.eq.s32.totalorder %s16, 0
    %p106 = por %p104, %p105
    %s107 = ssub.s32 %s10, %s17
    %p108 = scmp.eq.s32.totalorder %s107, 0
    %s110 = sadd.s32 %s109, 1
    %s111 = scalar_select %p108, %s109, %s110
    %p114 = pneg %p108
    %p115 = scmp.eq.s32.totalorder %s10, 1
    %p116 = por %p114, %p115
    %p117 = scmp.ne.s32.totalorder %s109, %s112
    %p118 = scmp.eq.s32.totalorder %s10, 0
    %p119 = por %p117, %p118
    %p120 = scmp.ne.s32.totalorder %s109, %s112
    %p121 = scmp.eq.s32.totalorder %s15, 1
    %p122 = por %p120, %p121
    %p123 = scmp.ne.s32.totalorder %s112, %s113
    %p124 = scmp.eq.s32.totalorder %s15, 0
    %p125 = por %p123, %p124
    %p126 = scmp.ne.s32.totalorder %s112, %s113
    %p127 = scmp.eq.s32.totalorder %s16, 1
    %p128 = por %p126, %p127
    %p130 = scmp.ne.s32.totalorder %s113, %s129
    %p131 = scmp.eq.s32.totalorder %s16, 0
    %p132 = por %p130, %p131
    %p133 = scmp.le.s32.totalorder 1, %s10
    %p134 = scmp.lt.s32.totalorder %s10, 3
    %p135 = pnand %p133, %p134
    %p136 = pneg %p135
    // Predicated region
    $region9: #{simple_card_classifier_forward.2} parent=5 // pred_check
      _
    $region10: #{simple_card_classifier_forward.2} parent=5 // pred_check_branch
      %138 = sbr.rel (%p135) target = $region12
    $region11: #{simple_card_classifier_forward.2} parent=5 // pred_region
      %s139 = ssub.s32 %s10, 1
      // Predicated region
      $region13: #{simple_card_classifier_forward.2} parent=11 // pred_check
        %p140 = pneg %p57
      $region14: #{simple_card_classifier_forward.2} parent=11 // pred_check_branch
        %142 = sbr.rel (%p140) target = $region16
      $region15: #{simple_card_classifier_forward.2} parent=11 // pred_region
        _
      $region16: #{simple_card_classifier_forward.2} parent=11 // pred_fallthru
        _
      // Predicated region
      $region17: #{simple_card_classifier_forward.2} parent=11 // pred_check
        %p143 = pneg %p78
      $region18: #{simple_card_classifier_forward.2} parent=11 // pred_check_branch
        %145 = sbr.rel (%p143) target = $region20
      $region19: #{simple_card_classifier_forward.2} parent=11 // pred_region
        _
      $region20: #{simple_card_classifier_forward.2} parent=11 // pred_fallthru
        _
      // Predicated region
      $region21: #{simple_card_classifier_forward.2} parent=11 // pred_check
        %p146 = pneg %p99
      $region22: #{simple_card_classifier_forward.2} parent=11 // pred_check_branch
        %148 = sbr.rel (%p146) target = $region24
      $region23: #{simple_card_classifier_forward.2} parent=11 // pred_region
        _
      $region24: #{simple_card_classifier_forward.2} parent=11 // pred_fallthru
        _
    $region12: #{simple_card_classifier_forward.2} parent=5 // pred_fallthru
      _
    %p149 = scmp.lt.s32.totalorder %s10, 2
    // Predicated region
    $region25: #{simple_card_classifier_forward.2} parent=5 // pred_check
      %p150 = pneg %p149
    $region26: #{simple_card_classifier_forward.2} parent=5 // pred_check_branch
      %152 = sbr.rel (%p150) target = $region28
    $region27: #{simple_card_classifier_forward.2} parent=5 // pred_region
      // Predicated region
      $region29: #{simple_card_classifier_forward.2} parent=27 // pred_check
        %p153 = pneg %p30
      $region30: #{simple_card_classifier_forward.2} parent=27 // pred_check_branch
        %155 = sbr.rel (%p153) target = $region32
      $region31: #{simple_card_classifier_forward.2} parent=27 // pred_region
        %p156 = scmp.lt.s32.totalorder %s10, 1
        %s157 = scalar_select %p156, %s10, 1
        %s158 = smul.addr %s157, 9
        %s159 = smul.addr %s158, 8
        %s160 = scalar_lea.vmem %s0, %s159
      $region32: #{simple_card_classifier_forward.2} parent=27 // pred_fallthru
        _
    $region28: #{simple_card_classifier_forward.2} parent=5 // pred_fallthru
      _
    %p161 = scmp.le.s32.totalorder 1, %s10
    %p162 = scmp.lt.s32.totalorder %s10, 3
    %p163 = pnand %p161, %p162
    %p164 = pneg %p163
    // Predicated region
    $region33: #{simple_card_classifier_forward.2} parent=5 // pred_check
      _
    $region34: #{simple_card_classifier_forward.2} parent=5 // pred_check_branch
      %166 = sbr.rel (%p163) target = $region36
    $region35: #{simple_card_classifier_forward.2} parent=5 // pred_region
      %s167 = ssub.s32 %s10, 1
      %p168 = scmp.lt.s32.totalorder %s15, 1
      %s169 = scalar_select %p168, %s15, 1
      %s170 = smul.addr %s169, 9
      %s171 = smul.addr %s170, 8
      %s172 = scalar_lea.vmem %s0, %s171
      %p173 = pneg %p36
      %p174 = pneg %p33
      %p175 = pneg %p57
      %p176 = pneg %p54
      %p177 = pneg %p78
      %p178 = pneg %p75
      %p179 = pneg %p99
      %p180 = pneg %p96
      %p181 = pneg %p125
      %p182 = pneg %p122
      %p183 = scmp.lt.s32.totalorder %s15, 1
      %s184 = scalar_select %p183, %s15, 1
      %s185 = smul.addr %s184, 16
      %s186 = smul.addr %s185, 4
      %s187 = scalar_lea.vmem %s4, %s186
      %p188 = scmp.lt.s32.totalorder %s15, 1
      %s189 = scalar_select %p188, %s15, 1
      %s190 = smul.addr %s189, 9
      %s191 = smul.addr %s190, 8
      %s192 = scalar_lea.vmem %s0, %s191
      %p193 = scmp.lt.s32.totalorder %s15, 1
      %s194 = scalar_select %p193, %s15, 1
      %s195 = smul.addr %s194, 16
      %s196 = smul.addr %s195, 4
      %s197 = scalar_lea.vmem %s4, %s196
      %v198 = vld [vmem:[%s2] sm:$0xff]
      %v199 = vld [vmem:[%s2 + $0x8] sm:$0xff]
      %201 = vset.pattern.permute.xlu0 0
      %202 = vperm.xlu0 %201, %v198
      %v203 = vpop.permute.xlu0 %202
      %206 = vset.pattern.permute.xlu0 0
      %207 = vperm.xlu0 %206, %v199
      %v208 = vpop.permute.xlu0 %207
      loop: start=0, step=1, limit=2
      $region37: #{simple_card_classifier_forward.2} parent=35 // loop_pre_header
        _
      $region38: #{simple_card_classifier_forward.2} parent=35 // loop_header
        %s211 = sphi 0, %s215
        %p212 = scmp.ge.s32.totalorder %s211, 2
      $region39: #{simple_card_classifier_forward.2} parent=35 // loop_header_branch
        %214 = sbr.rel (%p212) target = $region43
      $region40: #{simple_card_classifier_forward.2} parent=35 // loop_body
        %s216 = smul.u32 %s211, 8
        %s217 = scalar_lea.vmem %s192, %s216
        %v218 = vld [vmem:[%s217] sm:$0xff]
        %v219 = vld [vmem:[%s217 + $0x8] sm:$0x3]
        %s220 = sadd.s32 %s216, 24
        %s221 = scalar_lea.vmem %s192, %s220
        %v222 = vld [vmem:[%s221] sm:$0xff]
        %v223 = vld [vmem:[%s221 + $0x8] sm:$0x3]
        %s224 = sadd.s32 %s216, 48
        %s225 = scalar_lea.vmem %s192, %s224
        %v226 = vld [vmem:[%s225] sm:$0xff]
        %v227 = vld [vmem:[%s225 + $0x8] sm:$0x3]
        %v229 = vrot.slane %v222, 5
        %v232 = vrot.slane %v226, 2
        %vm234 = vcmask 1042432
        %v235 = vsel %vm234, %v218, %v229
        %vm236 = vcmask 1045504
        %v237 = vsel %vm236, %v235, %v232
        %v238 = vld [vmem:[%s1] sm:$0xff]
        %v239 = vld [vmem:[%s1 + $0x8] sm:$0xff]
        %v240 = vld [vmem:[%s1 + $0x10] sm:$0xff]
        %v241 = vld [vmem:[%s1 + $0x18] sm:$0xff]
        %v242 = vld [vmem:[%s1 + $0x20] sm:$0xff]
        %v243 = vld [vmem:[%s1 + $0x28] sm:$0xff]
        %vm244 = vcmask 72704
        %v246 = vsel %vm244, %v238, 0
        %v249 = vsel %vm244, %v239, 0
        %v252 = vsel %vm244, %v240, 0
        %v255 = vsel %vm244, %v241, 0
        %v258 = vsel %vm244, %v242, 0
        %v261 = vsel %vm244, %v243, 0
        %vm263 = vcmask 1040384
        %v264 = vsel %vm263, %v232, 0
        %266 = vmatprep.subr.mxu0 0.0
        %267 = vmatpush1.msra.mxu0 %v237
        %268 = vmatprep.subr.mxu0 0.0
        %269 = vmatpush1.msra.mxu0 %v264
        %270 = vmatprep.subr.mxu0 0.0
        %271 = vmatpush1.msra.mxu0 0.0
        %272 = vmatprep.subr.mxu0 0.0
        %273 = vmatpush1.msra.mxu0 0.0
        %274 = vmatprep.subr.mxu0 0.0
        %275 = vmatpush1.msra.mxu0 0.0
        %276 = vmatprep.subr.mxu0 0.0
        %277 = vmatpush1.msra.mxu0 0.0
        %278 = vmatprep.subr.mxu0 0.0
        %279 = vmatpush1.msra.mxu0 0.0
        %280 = vmatprep.subr.mxu0 0.0
        %281 = vmatpush1.msra.mxu0 0.0
        %282 = vmatprep.subr.mxu0 0.0
        %283 = vmatpush1.msra.mxu0 0.0
        %284 = vmatprep.subr.mxu0 0.0
        %285 = vmatpush1.msra.mxu0 0.0
        %286 = vmatprep.subr.mxu0 0.0
        %287 = vmatpush1.msra.mxu0 0.0
        %288 = vmatprep.subr.mxu0 0.0
        %289 = vmatpush1.msra.mxu0 0.0
        %290 = vmatprep.subr.mxu0 0.0
        %291 = vmatpush1.msra.mxu0 0.0
        %292 = vmatprep.subr.mxu0 0.0
        %293 = vmatpush1.msra.mxu0 0.0
        %294 = vmatprep.subr.mxu0 0.0
        %295 = vmatpush1.msra.mxu0 0.0
        %296 = vmatprep.subr.mxu0 0.0
        %297 = vmatpush1.msra.mxu0 0.0
        %298 = vmatprep.subr.mxu0 0.0
        %299 = vmatpush1.msra.mxu0 0.0
        %300 = vmatprep.subr.mxu0 0.0
        %301 = vmatpush1.msra.mxu0 0.0
        %302 = vmatprep.subr.mxu0 0.0
        %303 = vmatpush1.msra.mxu0 0.0
        %304 = vmatprep.subr.mxu0 0.0
        %305 = vmatpush1.msra.mxu0 0.0
        %306 = vmatprep.subr.mxu0 0.0
        %307 = vmatpush1.msra.mxu0 0.0
        %308 = vmatprep.subr.mxu0 0.0
        %309 = vmatpush1.msra.mxu0 0.0
        %310 = vmatprep.subr.mxu0 0.0
        %311 = vmatpush1.msra.mxu0 0.0
        %312 = vmatprep.subr.mxu0 0.0
        %313 = vmatpush1.msra.mxu0 0.0
        %314 = vmatprep.subr.mxu0 0.0
        %315 = vmatpush1.msra.mxu0 0.0
        %316 = vmatprep.subr.mxu0 0.0
        %317 = vmatpush1.msra.mxu0 0.0
        %318 = vmatprep.subr.mxu0 0.0
        %319 = vmatpush1.msra.mxu0 0.0
        %320 = vmatprep.subr.mxu0 0.0
        %321 = vmatpush1.msra.mxu0 0.0
        %322 = vmatprep.subr.mxu0 0.0
        %323 = vmatpush1.msra.mxu0 0.0
        %324 = vmatprep.subr.mxu0 0.0
        %325 = vmatpush1.msra.mxu0 0.0
        %326 = vmatprep.subr.mxu0 0.0
        %327 = vmatpush1.msra.mxu0 0.0
        %328 = vmatprep.subr.mxu0 0.0
        %329 = vmatpush1.msra.mxu0 0.0
        %330 = vmatprep.mubr.f32.mxu0 0.0
        %331 = vmatmul.mubr.f32.gmra.mrb[0].mxu0 %v246
        %v332 = vpop.f32.mrb[0].mxu0
        %v333 = vadd.f32 0.0, %v332
        %v334 = vpop.f32.mrb[0].mxu0
        %335 = vmatprep.mubr.f32.mxu0 0.0
        %336 = vmatmul.mubr.f32.gmra.mrb[0].mxu0 %v249
        %v337 = vpop.f32.mrb[0].mxu0
        %v338 = vadd.f32 0.0, %v337
        %v339 = vpop.f32.mrb[0].mxu0
        %340 = vmatprep.mubr.f32.mxu0 0.0
        %341 = vmatmul.mubr.f32.gmra.mrb[0].mxu0 %v252
        %v342 = vpop.f32.mrb[0].mxu0
        %v343 = vadd.f32 0.0, %v342
        %v344 = vpop.f32.mrb[0].mxu0
        %345 = vmatprep.mubr.f32.mxu0 0.0
        %346 = vmatmul.mubr.f32.gmra.mrb[0].mxu0 %v255
        %v347 = vpop.f32.mrb[0].mxu0
        %v348 = vadd.f32 0.0, %v347
        %v349 = vpop.f32.mrb[0].mxu0
        %350 = vmatprep.mubr.f32.mxu0 0.0
        %351 = vmatmul.mubr.f32.gmra.mrb[0].mxu0 %v258
        %v352 = vpop.f32.mrb[0].mxu0
        %v353 = vadd.f32 0.0, %v352
        %v354 = vpop.f32.mrb[0].mxu0
        %355 = vmatprep.mubr.f32.mxu0 0.0
        %356 = vmatmul.mubr.f32.gmra.mrb[0].mxu0 %v261
        %v357 = vpop.f32.mrb[0].mxu0
        %v358 = vadd.f32 0.0, %v357
        %v359 = vpop.f32.mrb[0].mxu0
        %360 = vdwg.mxu0
        %363 = vrot.lane.b32.xlu0 %v343, 127
        %v364 = vpop.permute.xlu0 %363
        %365 = vrot.lane.b32.xlu0 %v348, 127
        %v366 = vpop.permute.xlu0 %365
        %v369 = vadd.f32 %v333, %v364
        %v370 = vadd.f32 %v338, %v366
        %373 = vrot.lane.b32.xlu0 %v353, 126
        %v374 = vpop.permute.xlu0 %373
        %375 = vrot.lane.b32.xlu0 %v358, 126
        %v376 = vpop.permute.xlu0 %375
        %v379 = vadd.f32 %v369, %v374
        %v380 = vadd.f32 %v370, %v376
        %v382 = vrot.slane %v218, 1
        %v384 = vrot.slane %v222, 6
        %v386 = vrot.slane %v226, 3
        %v388 = vsel %vm234, %v382, %v384
        %v389 = vsel %vm236, %v388, %v386
        %v390 = vsel %vm263, %v386, 0
        %392 = vmatprep.subr.mxu0 0.0
        %393 = vmatpush1.msra.mxu0 %v389
        %394 = vmatprep.subr.mxu0 0.0
        %395 = vmatpush1.msra.mxu0 %v390
        %396 = vmatprep.subr.mxu0 0.0
        %397 = vmatpush1.msra.mxu0 0.0
        %398 = vmatprep.subr.mxu0 0.0
        %399 = vmatpush1.msra.mxu0 0.0
        %400 = vmatprep.subr.mxu0 0.0
        %401 = vmatpush1.msra.mxu0 0.0
        %402 = vmatprep.subr.mxu0 0.0
        %403 = vmatpush1.msra.mxu0 0.0
        %404 = vmatprep.subr.mxu0 0.0
        %405 = vmatpush1.msra.mxu0 0.0
        %406 = vmatprep.subr.mxu0 0.0
        %407 = vmatpush1.msra.mxu0 0.0
        %408 = vmatprep.subr.mxu0 0.0
        %409 = vmatpush1.msra.mxu0 0.0
        %410 = vmatprep.subr.mxu0 0.0
        %411 = vmatpush1.msra.mxu0 0.0
        %412 = vmatprep.subr.mxu0 0.0
        %413 = vmatpush1.msra.mxu0 0.0
        %414 = vmatprep.subr.mxu0 0.0
        %415 = vmatpush1.msra.mxu0 0.0
        %416 = vmatprep.subr.mxu0 0.0
        %417 = vmatpush1.msra.mxu0 0.0
        %418 = vmatprep.subr.mxu0 0.0
        %419 = vmatpush1.msra.mxu0 0.0
        %420 = vmatprep.subr.mxu0 0.0
        %421 = vmatpush1.msra.mxu0 0.0
        %422 = vmatprep.subr.mxu0 0.0
        %423 = vmatpush1.msra.mxu0 0.0
        %424 = vmatprep.subr.mxu0 0.0
        %425 = vmatpush1.msra.mxu0 0.0
        %426 = vmatprep.subr.mxu0 0.0
        %427 = vmatpush1.msra.mxu0 0.0
        %428 = vmatprep.subr.mxu0 0.0
        %429 = vmatpush1.msra.mxu0 0.0
        %430 = vmatprep.subr.mxu0 0.0
        %431 = vmatpush1.msra.mxu0 0.0
        %432 = vmatprep.subr.mxu0 0.0
        %433 = vmatpush1.msra.mxu0 0.0
        %434 = vmatprep.subr.mxu0 0.0
        %435 = vmatpush1.msra.mxu0 0.0
        %436 = vmatprep.subr.mxu0 0.0
        %437 = vmatpush1.msra.mxu0 0.0
        %438 = vmatprep.subr.mxu0 0.0
        %439 = vmatpush1.msra.mxu0 0.0
        %440 = vmatprep.subr.mxu0 0.0
        %441 = vmatpush1.msra.mxu0 0.0
        %442 = vmatprep.subr.mxu0 0.0
        %443 = vmatpush1.msra.mxu0 0.0
        %444 = vmatprep.subr.mxu0 0.0
        %445 = vmatpush1.msra.mxu0 0.0
        %446 = vmatprep.subr.mxu0 0.0
        %447 = vmatpush1.msra.mxu0 0.0
        %448 = vmatprep.subr.mxu0 0.0
        %449 = vmatpush1.msra.mxu0 0.0
        %450 = vmatprep.subr.mxu0 0.0
        %451 = vmatpush1.msra.mxu0 0.0
        %452 = vmatprep.subr.mxu0 0.0
        %453 = vmatpush1.msra.mxu0 0.0
        %454 = vmatprep.subr.mxu0 0.0
        %455 = vmatpush1.msra.mxu0 0.0
        %456 = vmatprep.mubr.f32.mxu0 0.0
        %457 = vmatmul.mubr.f32.gmra.mrb[0].mxu0 %v246
        %v458 = vpop.f32.mrb[0].mxu0
        %v459 = vadd.f32 0.0, %v458
        %v460 = vpop.f32.mrb[0].mxu0
        %461 = vmatprep.mubr.f32.mxu0 0.0
        %462 = vmatmul.mubr.f32.gmra.mrb[0].mxu0 %v249
        %v463 = vpop.f32.mrb[0].mxu0
        %v464 = vadd.f32 0.0, %v463
        %v465 = vpop.f32.mrb[0].mxu0
        %466 = vmatprep.mubr.f32.mxu0 0.0
        %467 = vmatmul.mubr.f32.gmra.mrb[0].mxu0 %v252
        %v468 = vpop.f32.mrb[0].mxu0
        %v469 = vadd.f32 0.0, %v468
        %v470 = vpop.f32.mrb[0].mxu0
        %471 = vmatprep.mubr.f32.mxu0 0.0
        %472 = vmatmul.mubr.f32.gmra.mrb[0].mxu0 %v255
        %v473 = vpop.f32.mrb[0].mxu0
        %v474 = vadd.f32 0.0, %v473
        %v475 = vpop.f32.mrb[0].mxu0
        %476 = vmatprep.mubr.f32.mxu0 0.0
        %477 = vmatmul.mubr.f32.gmra.mrb[0].mxu0 %v258
        %v478 = vpop.f32.mrb[0].mxu0
        %v479 = vadd.f32 0.0, %v478
        %v480 = vpop.f32.mrb[0].mxu0
        %481 = vmatprep.mubr.f32.mxu0 0.0
        %482 = vmatmul.mubr.f32.gmra.mrb[0].mxu0 %v261
        %v483 = vpop.f32.mrb[0].mxu0
        %v484 = vadd.f32 0.0, %v483
        %v485 = vpop.f32.mrb[0].mxu0
        %486 = vdwg.mxu0
        %489 = vrot.lane.b32.xlu0 %v469, 127
        %v490 = vpop.permute.xlu0 %489
        %491 = vrot.lane.b32.xlu0 %v474, 127
        %v492 = vpop.permute.xlu0 %491
        %v495 = vadd.f32 %v459, %v490
        %v496 = vadd.f32 %v464, %v492
        %499 = vrot.lane.b32.xlu0 %v479, 126
        %v500 = vpop.permute.xlu0 %499
        %501 = vrot.lane.b32.xlu0 %v484, 126
        %v502 = vpop.permute.xlu0 %501
        %v505 = vadd.f32 %v495, %v500
        %v506 = vadd.f32 %v496, %v502
        %v507 = vmax.f32 %v379, %v505
        %v508 = vmax.f32 %v380, %v506
        %511 = vrot.lane.b32.xlu0 %v507, 127
        %v512 = vpop.permute.xlu0 %511
        %513 = vrot.lane.b32.xlu0 %v508, 127
        %v514 = vpop.permute.xlu0 %513
        %v517 = vmax.f32 %v507, %v512
        %v518 = vmax.f32 %v508, %v514
        %v519 = vld [vmem:[%s3] sm:$0xff]
        %v520 = vld [vmem:[%s3 + $0x8] sm:$0x7f]
        %vm521 = vcmask 121856
        %v523 = vsel %vm521, %v517, 0
        %v526 = vsel %vm521, %v518, 0
        %vm528 = vcmask 1046528
        %v530 = vsel %vm528, %v520, 0
        %532 = vmatprep.subr.mxu0 0.0
        %533 = vmatpush1.msra.mxu0 %v519
        %534 = vmatprep.subr.mxu0 0.0
        %535 = vmatpush1.msra.mxu0 %v530
        %536 = vmatprep.subr.mxu0 0.0
        %537 = vmatpush1.msra.mxu0 0.0
        %538 = vmatprep.subr.mxu0 0.0
        %539 = vmatpush1.msra.mxu0 0.0
        %540 = vmatprep.subr.mxu0 0.0
        %541 = vmatpush1.msra.mxu0 0.0
        %542 = vmatprep.subr.mxu0 0.0
        %543 = vmatpush1.msra.mxu0 0.0
        %544 = vmatprep.subr.mxu0 0.0
        %545 = vmatpush1.msra.mxu0 0.0
        %546 = vmatprep.subr.mxu0 0.0
        %547 = vmatpush1.msra.mxu0 0.0
        %548 = vmatprep.subr.mxu0 0.0
        %549 = vmatpush1.msra.mxu0 0.0
        %550 = vmatprep.subr.mxu0 0.0
        %551 = vmatpush1.msra.mxu0 0.0
        %552 = vmatprep.subr.mxu0 0.0
        %553 = vmatpush1.msra.mxu0 0.0
        %554 = vmatprep.subr.mxu0 0.0
        %555 = vmatpush1.msra.mxu0 0.0
        %556 = vmatprep.subr.mxu0 0.0
        %557 = vmatpush1.msra.mxu0 0.0
        %558 = vmatprep.subr.mxu0 0.0
        %559 = vmatpush1.msra.mxu0 0.0
        %560 = vmatprep.subr.mxu0 0.0
        %561 = vmatpush1.msra.mxu0 0.0
        %562 = vmatprep.subr.mxu0 0.0
        %563 = vmatpush1.msra.mxu0 0.0
        %564 = vmatprep.subr.mxu0 0.0
        %565 = vmatpush1.msra.mxu0 0.0
        %566 = vmatprep.subr.mxu0 0.0
        %567 = vmatpush1.msra.mxu0 0.0
        %568 = vmatprep.subr.mxu0 0.0
        %569 = vmatpush1.msra.mxu0 0.0
        %570 = vmatprep.subr.mxu0 0.0
        %571 = vmatpush1.msra.mxu0 0.0
        %572 = vmatprep.subr.mxu0 0.0
        %573 = vmatpush1.msra.mxu0 0.0
        %574 = vmatprep.subr.mxu0 0.0
        %575 = vmatpush1.msra.mxu0 0.0
        %576 = vmatprep.subr.mxu0 0.0
        %577 = vmatpush1.msra.mxu0 0.0
        %578 = vmatprep.subr.mxu0 0.0
        %579 = vmatpush1.msra.mxu0 0.0
        %580 = vmatprep.subr.mxu0 0.0
        %581 = vmatpush1.msra.mxu0 0.0
        %582 = vmatprep.subr.mxu0 0.0
        %583 = vmatpush1.msra.mxu0 0.0
        %584 = vmatprep.subr.mxu0 0.0
        %585 = vmatpush1.msra.mxu0 0.0
        %586 = vmatprep.subr.mxu0 0.0
        %587 = vmatpush1.msra.mxu0 0.0
        %588 = vmatprep.subr.mxu0 0.0
        %589 = vmatpush1.msra.mxu0 0.0
        %590 = vmatprep.subr.mxu0 0.0
        %591 = vmatpush1.msra.mxu0 0.0
        %592 = vmatprep.subr.mxu0 0.0
        %593 = vmatpush1.msra.mxu0 0.0
        %594 = vmatprep.subr.mxu0 0.0
        %595 = vmatpush1.msra.mxu0 0.0
        %596 = vmatprep.mubr.f32.mxu0 0.0
        %597 = vmatmul.mubr.f32.gmra.mrb[0].mxu0 %v523
        %v598 = vpop.f32.mrb[0].mxu0
        %v599 = vadd.f32 %v203, %v598
        %v600 = vpop.f32.mrb[0].mxu0
        %601 = vmatprep.mubr.f32.mxu0 0.0
        %602 = vmatmul.mubr.f32.gmra.mrb[0].mxu0 %v526
        %v603 = vpop.f32.mrb[0].mxu0
        %v604 = vadd.f32 %v208, %v603
        %v605 = vpop.f32.mrb[0].mxu0
        %606 = vdwg.mxu0
        %v607 = vmax.f32 %v599, 0.0
        %v608 = vmax.f32 %v604, 0.0
        %v609 = vpack.c.bf16 %v608, %v607
        %s610 = smul.u32 %s211, 4
        %v612 = vunpack.c.l.b16 %v609
        %v613 = vunpack.c.h.b16 %v609
        %v614 = vpack.c.b16 %v612, %v612
        %v615 = vpack.c.b16 %v613, %v613
        %s618 = smul.u32 %s610, 2
        %s619 = smul.addr %s618, 4
        %s620 = scalar_lea.vmem %s197, %s619
        %vm621 = vcmask 60416
        %622 = vst.msk [vmem:[%s620] sm:$0xf] %vm621, %v614
        %623 = vst.msk [vmem:[%s620 + $0x4] sm:$0xf] %vm621, %v615
        %v624 = vrot.slane %v218, 2
        %v626 = vrot.slane %v222, 7
        %v628 = vrot.slane %v226, 4
        %v630 = vsel %vm234, %v624, %v626
        %v631 = vsel %vm236, %v630, %v628
        %v632 = vld [vmem:[%s1] sm:$0xff]
        %v633 = vld [vmem:[%s1 + $0x8] sm:$0xff]
        %v634 = vld [vmem:[%s1 + $0x10] sm:$0xff]
        %v635 = vld [vmem:[%s1 + $0x18] sm:$0xff]
        %v636 = vld [vmem:[%s1 + $0x20] sm:$0xff]
        %v637 = vld [vmem:[%s1 + $0x28] sm:$0xff]
        %v639 = vsel %vm244, %v632, 0
        %v642 = vsel %vm244, %v633, 0
        %v645 = vsel %vm244, %v634, 0
        %v648 = vsel %vm244, %v635, 0
        %v651 = vsel %vm244, %v636, 0
        %v654 = vsel %vm244, %v637, 0
        %v656 = vsel %vm263, %v628, 0
        %658 = vmatprep.subr.mxu0 0.0
        %659 = vmatpush1.msra.mxu0 %v631
        %660 = vmatprep.subr.mxu0 0.0
        %661 = vmatpush1.msra.mxu0 %v656
        %662 = vmatprep.subr.mxu0 0.0
        %663 = vmatpush1.msra.mxu0 0.0
        %664 = vmatprep.subr.mxu0 0.0
        %665 = vmatpush1.msra.mxu0 0.0
        %666 = vmatprep.subr.mxu0 0.0
        %667 = vmatpush1.msra.mxu0 0.0
        %668 = vmatprep.subr.mxu0 0.0
        %669 = vmatpush1.msra.mxu0 0.0
        %670 = vmatprep.subr.mxu0 0.0
        %671 = vmatpush1.msra.mxu0 0.0
        %672 = vmatprep.subr.mxu0 0.0
        %673 = vmatpush1.msra.mxu0 0.0
        %674 = vmatprep.subr.mxu0 0.0
        %675 = vmatpush1.msra.mxu0 0.0
        %676 = vmatprep.subr.mxu0 0.0
        %677 = vmatpush1.msra.mxu0 0.0
        %678 = vmatprep.subr.mxu0 0.0
        %679 = vmatpush1.msra.mxu0 0.0
        %680 = vmatprep.subr.mxu0 0.0
        %681 = vmatpush1.msra.mxu0 0.0
        %682 = vmatprep.subr.mxu0 0.0
        %683 = vmatpush1.msra.mxu0 0.0
        %684 = vmatprep.subr.mxu0 0.0
        %685 = vmatpush1.msra.mxu0 0.0
        %686 = vmatprep.subr.mxu0 0.0
        %687 = vmatpush1.msra.mxu0 0.0
        %688 = vmatprep.subr.mxu0 0.0
        %689 = vmatpush1.msra.mxu0 0.0
        %690 = vmatprep.subr.mxu0 0.0
        %691 = vmatpush1.msra.mxu0 0.0
        %692 = vmatprep.subr.mxu0 0.0
        %693 = vmatpush1.msra.mxu0 0.0
        %694 = vmatprep.subr.mxu0 0.0
        %695 = vmatpush1.msra.mxu0 0.0
        %696 = vmatprep.subr.mxu0 0.0
        %697 = vmatpush1.msra.mxu0 0.0
        %698 = vmatprep.subr.mxu0 0.0
        %699 = vmatpush1.msra.mxu0 0.0
        %700 = vmatprep.subr.mxu0 0.0
        %701 = vmatpush1.msra.mxu0 0.0
        %702 = vmatprep.subr.mxu0 0.0
        %703 = vmatpush1.msra.mxu0 0.0
        %704 = vmatprep.subr.mxu0 0.0
        %705 = vmatpush1.msra.mxu0 0.0
        %706 = vmatprep.subr.mxu0 0.0
        %707 = vmatpush1.msra.mxu0 0.0
        %708 = vmatprep.subr.mxu0 0.0
        %709 = vmatpush1.msra.mxu0 0.0
        %710 = vmatprep.subr.mxu0 0.0
        %711 = vmatpush1.msra.mxu0 0.0
        %712 = vmatprep.subr.mxu0 0.0
        %713 = vmatpush1.msra.mxu0 0.0
        %714 = vmatprep.subr.mxu0 0.0
        %715 = vmatpush1.msra.mxu0 0.0
        %716 = vmatprep.subr.mxu0 0.0
        %717 = vmatpush1.msra.mxu0 0.0
        %718 = vmatprep.subr.mxu0 0.0
        %719 = vmatpush1.msra.mxu0 0.0
        %720 = vmatprep.subr.mxu0 0.0
        %721 = vmatpush1.msra.mxu0 0.0
        %722 = vmatprep.mubr.f32.mxu0 0.0
        %723 = vmatmul.mubr.f32.gmra.mrb[0].mxu0 %v639
        %v724 = vpop.f32.mrb[0].mxu0
        %v725 = vadd.f32 0.0, %v724
        %v726 = vpop.f32.mrb[0].mxu0
        %727 = vmatprep.mubr.f32.mxu0 0.0
        %728 = vmatmul.mubr.f32.gmra.mrb[0].mxu0 %v642
        %v729 = vpop.f32.mrb[0].mxu0
        %v730 = vadd.f32 0.0, %v729
        %v731 = vpop.f32.mrb[0].mxu0
        %732 = vmatprep.mubr.f32.mxu0 0.0
        %733 = vmatmul.mubr.f32.gmra.mrb[0].mxu0 %v645
        %v734 = vpop.f32.mrb[0].mxu0
        %v735 = vadd.f32 0.0, %v734
        %v736 = vpop.f32.mrb[0].mxu0
        %737 = vmatprep.mubr.f32.mxu0 0.0
        %738 = vmatmul.mubr.f32.gmra.mrb[0].mxu0 %v648
        %v739 = vpop.f32.mrb[0].mxu0
        %v740 = vadd.f32 0.0, %v739
        %v741 = vpop.f32.mrb[0].mxu0
        %742 = vmatprep.mubr.f32.mxu0 0.0
        %743 = vmatmul.mubr.f32.gmra.mrb[0].mxu0 %v651
        %v744 = vpop.f32.mrb[0].mxu0
        %v745 = vadd.f32 0.0, %v744
        %v746 = vpop.f32.mrb[0].mxu0
        %747 = vmatprep.mubr.f32.mxu0 0.0
        %748 = vmatmul.mubr.f32.gmra.mrb[0].mxu0 %v654
        %v749 = vpop.f32.mrb[0].mxu0
        %v750 = vadd.f32 0.0, %v749
        %v751 = vpop.f32.mrb[0].mxu0
        %752 = vdwg.mxu0
        %755 = vrot.lane.b32.xlu0 %v735, 127
        %v756 = vpop.permute.xlu0 %755
        %757 = vrot.lane.b32.xlu0 %v740, 127
        %v758 = vpop.permute.xlu0 %757
        %v761 = vadd.f32 %v725, %v756
        %v762 = vadd.f32 %v730, %v758
        %765 = vrot.lane.b32.xlu0 %v745, 126
        %v766 = vpop.permute.xlu0 %765
        %767 = vrot.lane.b32.xlu0 %v750, 126
        %v768 = vpop.permute.xlu0 %767
        %v771 = vadd.f32 %v761, %v766
        %v772 = vadd.f32 %v762, %v768
        %v773 = vrot.slane %v218, 3
        %v775 = vrot.slane %v226, 5
        %v777 = vsel %vm234, %v773, %v222
        %v778 = vsel %vm236, %v777, %v775
        %v779 = vsel %vm263, %v775, 0
        %781 = vmatprep.subr.mxu0 0.0
        %782 = vmatpush1.msra.mxu0 %v778
        %783 = vmatprep.subr.mxu0 0.0
        %784 = vmatpush1.msra.mxu0 %v779
        %785 = vmatprep.subr.mxu0 0.0
        %786 = vmatpush1.msra.mxu0 0.0
        %787 = vmatprep.subr.mxu0 0.0
        %788 = vmatpush1.msra.mxu0 0.0
        %789 = vmatprep.subr.mxu0 0.0
        %790 = vmatpush1.msra.mxu0 0.0
        %791 = vmatprep.subr.mxu0 0.0
        %792 = vmatpush1.msra.mxu0 0.0
        %793 = vmatprep.subr.mxu0 0.0
        %794 = vmatpush1.msra.mxu0 0.0
        %795 = vmatprep.subr.mxu0 0.0
        %796 = vmatpush1.msra.mxu0 0.0
        %797 = vmatprep.subr.mxu0 0.0
        %798 = vmatpush1.msra.mxu0 0.0
        %799 = vmatprep.subr.mxu0 0.0
        %800 = vmatpush1.msra.mxu0 0.0
        %801 = vmatprep.subr.mxu0 0.0
        %802 = vmatpush1.msra.mxu0 0.0
        %803 = vmatprep.subr.mxu0 0.0
        %804 = vmatpush1.msra.mxu0 0.0
        %805 = vmatprep.subr.mxu0 0.0
        %806 = vmatpush1.msra.mxu0 0.0
        %807 = vmatprep.subr.mxu0 0.0
        %808 = vmatpush1.msra.mxu0 0.0
        %809 = vmatprep.subr.mxu0 0.0
        %810 = vmatpush1.msra.mxu0 0.0
        %811 = vmatprep.subr.mxu0 0.0
        %812 = vmatpush1.msra.mxu0 0.0
        %813 = vmatprep.subr.mxu0 0.0
        %814 = vmatpush1.msra.mxu0 0.0
        %815 = vmatprep.subr.mxu0 0.0
        %816 = vmatpush1.msra.mxu0 0.0
        %817 = vmatprep.subr.mxu0 0.0
        %818 = vmatpush1.msra.mxu0 0.0
        %819 = vmatprep.subr.mxu0 0.0
        %820 = vmatpush1.msra.mxu0 0.0
        %821 = vmatprep.subr.mxu0 0.0
        %822 = vmatpush1.msra.mxu0 0.0
        %823 = vmatprep.subr.mxu0 0.0
        %824 = vmatpush1.msra.mxu0 0.0
        %825 = vmatprep.subr.mxu0 0.0
        %826 = vmatpush1.msra.mxu0 0.0
        %827 = vmatprep.subr.mxu0 0.0
        %828 = vmatpush1.msra.mxu0 0.0
        %829 = vmatprep.subr.mxu0 0.0
        %830 = vmatpush1.msra.mxu0 0.0
        %831 = vmatprep.subr.mxu0 0.0
        %832 = vmatpush1.msra.mxu0 0.0
        %833 = vmatprep.subr.mxu0 0.0
        %834 = vmatpush1.msra.mxu0 0.0
        %835 = vmatprep.subr.mxu0 0.0
        %836 = vmatpush1.msra.mxu0 0.0
        %837 = vmatprep.subr.mxu0 0.0
        %838 = vmatpush1.msra.mxu0 0.0
        %839 = vmatprep.subr.mxu0 0.0
        %840 = vmatpush1.msra.mxu0 0.0
        %841 = vmatprep.subr.mxu0 0.0
        %842 = vmatpush1.msra.mxu0 0.0
        %843 = vmatprep.subr.mxu0 0.0
        %844 = vmatpush1.msra.mxu0 0.0
        %845 = vmatprep.mubr.f32.mxu0 0.0
        %846 = vmatmul.mubr.f32.gmra.mrb[0].mxu0 %v639
        %v847 = vpop.f32.mrb[0].mxu0
        %v848 = vadd.f32 0.0, %v847
        %v849 = vpop.f32.mrb[0].mxu0
        %850 = vmatprep.mubr.f32.mxu0 0.0
        %851 = vmatmul.mubr.f32.gmra.mrb[0].mxu0 %v642
        %v852 = vpop.f32.mrb[0].mxu0
        %v853 = vadd.f32 0.0, %v852
        %v854 = vpop.f32.mrb[0].mxu0
        %855 = vmatprep.mubr.f32.mxu0 0.0
        %856 = vmatmul.mubr.f32.gmra.mrb[0].mxu0 %v645
        %v857 = vpop.f32.mrb[0].mxu0
        %v858 = vadd.f32 0.0, %v857
        %v859 = vpop.f32.mrb[0].mxu0
        %860 = vmatprep.mubr.f32.mxu0 0.0
        %861 = vmatmul.mubr.f32.gmra.mrb[0].mxu0 %v648
        %v862 = vpop.f32.mrb[0].mxu0
        %v863 = vadd.f32 0.0, %v862
        %v864 = vpop.f32.mrb[0].mxu0
        %865 = vmatprep.mubr.f32.mxu0 0.0
        %866 = vmatmul.mubr.f32.gmra.mrb[0].mxu0 %v651
        %v867 = vpop.f32.mrb[0].mxu0
        %v868 = vadd.f32 0.0, %v867
        %v869 = vpop.f32.mrb[0].mxu0
        %870 = vmatprep.mubr.f32.mxu0 0.0
        %871 = vmatmul.mubr.f32.gmra.mrb[0].mxu0 %v654
        %v872 = vpop.f32.mrb[0].mxu0
        %v873 = vadd.f32 0.0, %v872
        %v874 = vpop.f32.mrb[0].mxu0
        %875 = vdwg.mxu0
        %878 = vrot.lane.b32.xlu0 %v858, 127
        %v879 = vpop.permute.xlu0 %878
        %880 = vrot.lane.b32.xlu0 %v863, 127
        %v881 = vpop.permute.xlu0 %880
        %v884 = vadd.f32 %v848, %v879
        %v885 = vadd.f32 %v853, %v881
        %888 = vrot.lane.b32.xlu0 %v868, 126
        %v889 = vpop.permute.xlu0 %888
        %890 = vrot.lane.b32.xlu0 %v873, 126
        %v891 = vpop.permute.xlu0 %890
        %v894 = vadd.f32 %v884, %v889
        %v895 = vadd.f32 %v885, %v891
        %v896 = vmax.f32 %v771, %v894
        %v897 = vmax.f32 %v772, %v895
        %900 = vrot.lane.b32.xlu0 %v896, 127
        %v901 = vpop.permute.xlu0 %900
        %902 = vrot.lane.b32.xlu0 %v897, 127
        %v903 = vpop.permute.xlu0 %902
        %v906 = vmax.f32 %v896, %v901
        %v907 = vmax.f32 %v897, %v903
        %v908 = vld [vmem:[%s3] sm:$0xff]
        %v909 = vld [vmem:[%s3 + $0x8] sm:$0x7f]
        %v911 = vsel %vm521, %v906, 0
        %v914 = vsel %vm521, %v907, 0
        %v917 = vsel %vm528, %v909, 0
        %919 = vmatprep.subr.mxu0 0.0
        %920 = vmatpush1.msra.mxu0 %v908
        %921 = vmatprep.subr.mxu0 0.0
        %922 = vmatpush1.msra.mxu0 %v917
        %923 = vmatprep.subr.mxu0 0.0
        %924 = vmatpush1.msra.mxu0 0.0
        %925 = vmatprep.subr.mxu0 0.0
        %926 = vmatpush1.msra.mxu0 0.0
        %927 = vmatprep.subr.mxu0 0.0
        %928 = vmatpush1.msra.mxu0 0.0
        %929 = vmatprep.subr.mxu0 0.0
        %930 = vmatpush1.msra.mxu0 0.0
        %931 = vmatprep.subr.mxu0 0.0
        %932 = vmatpush1.msra.mxu0 0.0
        %933 = vmatprep.subr.mxu0 0.0
        %934 = vmatpush1.msra.mxu0 0.0
        %935 = vmatprep.subr.mxu0 0.0
        %936 = vmatpush1.msra.mxu0 0.0
        %937 = vmatprep.subr.mxu0 0.0
        %938 = vmatpush1.msra.mxu0 0.0
        %939 = vmatprep.subr.mxu0 0.0
        %940 = vmatpush1.msra.mxu0 0.0
        %941 = vmatprep.subr.mxu0 0.0
        %942 = vmatpush1.msra.mxu0 0.0
        %943 = vmatprep.subr.mxu0 0.0
        %944 = vmatpush1.msra.mxu0 0.0
        %945 = vmatprep.subr.mxu0 0.0
        %946 = vmatpush1.msra.mxu0 0.0
        %947 = vmatprep.subr.mxu0 0.0
        %948 = vmatpush1.msra.mxu0 0.0
        %949 = vmatprep.subr.mxu0 0.0
        %950 = vmatpush1.msra.mxu0 0.0
        %951 = vmatprep.subr.mxu0 0.0
        %952 = vmatpush1.msra.mxu0 0.0
        %953 = vmatprep.subr.mxu0 0.0
        %954 = vmatpush1.msra.mxu0 0.0
        %955 = vmatprep.subr.mxu0 0.0
        %956 = vmatpush1.msra.mxu0 0.0
        %957 = vmatprep.subr.mxu0 0.0
        %958 = vmatpush1.msra.mxu0 0.0
        %959 = vmatprep.subr.mxu0 0.0
        %960 = vmatpush1.msra.mxu0 0.0
        %961 = vmatprep.subr.mxu0 0.0
        %962 = vmatpush1.msra.mxu0 0.0
        %963 = vmatprep.subr.mxu0 0.0
        %964 = vmatpush1.msra.mxu0 0.0
        %965 = vmatprep.subr.mxu0 0.0
        %966 = vmatpush1.msra.mxu0 0.0
        %967 = vmatprep.subr.mxu0 0.0
        %968 = vmatpush1.msra.mxu0 0.0
        %969 = vmatprep.subr.mxu0 0.0
        %970 = vmatpush1.msra.mxu0 0.0
        %971 = vmatprep.subr.mxu0 0.0
        %972 = vmatpush1.msra.mxu0 0.0
        %973 = vmatprep.subr.mxu0 0.0
        %974 = vmatpush1.msra.mxu0 0.0
        %975 = vmatprep.subr.mxu0 0.0
        %976 = vmatpush1.msra.mxu0 0.0
        %977 = vmatprep.subr.mxu0 0.0
        %978 = vmatpush1.msra.mxu0 0.0
        %979 = vmatprep.subr.mxu0 0.0
        %980 = vmatpush1.msra.mxu0 0.0
        %981 = vmatprep.subr.mxu0 0.0
        %982 = vmatpush1.msra.mxu0 0.0
        %983 = vmatprep.mubr.f32.mxu0 0.0
        %984 = vmatmul.mubr.f32.gmra.mrb[0].mxu0 %v911
        %v985 = vpop.f32.mrb[0].mxu0
        %v986 = vadd.f32 %v203, %v985
        %v987 = vpop.f32.mrb[0].mxu0
        %988 = vmatprep.mubr.f32.mxu0 0.0
        %989 = vmatmul.mubr.f32.gmra.mrb[0].mxu0 %v914
        %v990 = vpop.f32.mrb[0].mxu0
        %v991 = vadd.f32 %v208, %v990
        %v992 = vpop.f32.mrb[0].mxu0
        %993 = vdwg.mxu0
        %v994 = vmax.f32 %v986, 0.0
        %v995 = vmax.f32 %v991, 0.0
        %v996 = vpack.c.bf16 %v995, %v994
        %s997 = sadd.s32 %s610, 1
        %v999 = vunpack.c.l.b16 %v996
        %v1000 = vunpack.c.h.b16 %v996
        %v1001 = vpack.c.b16 %v999, %v999
        %v1002 = vpack.c.b16 %v1000, %v1000
        %s1005 = smul.u32 %s997, 2
        %s1006 = smul.addr %s1005, 4
        %s1007 = scalar_lea.vmem %s197, %s1006
        %1008 = vst.msk [vmem:[%s1007] sm:$0xf] %vm621, %v1001
        %1009 = vst.msk [vmem:[%s1007 + $0x4] sm:$0xf] %vm621, %v1002
        %v1010 = vrot.slane %v218, 4
        %v1012 = vrot.slane %v222, 1
        %v1014 = vrot.slane %v226, 6
        %v1016 = vsel %vm234, %v1010, %v1012
        %v1017 = vsel %vm236, %v1016, %v1014
        %v1018 = vld [vmem:[%s1] sm:$0xff]
        %v1019 = vld [vmem:[%s1 + $0x8] sm:$0xff]
        %v1020 = vld [vmem:[%s1 + $0x10] sm:$0xff]
        %v1021 = vld [vmem:[%s1 + $0x18] sm:$0xff]
        %v1022 = vld [vmem:[%s1 + $0x20] sm:$0xff]
        %v1023 = vld [vmem:[%s1 + $0x28] sm:$0xff]
        %v1025 = vsel %vm244, %v1018, 0
        %v1028 = vsel %vm244, %v1019, 0
        %v1031 = vsel %vm244, %v1020, 0
        %v1034 = vsel %vm244, %v1021, 0
        %v1037 = vsel %vm244, %v1022, 0
        %v1040 = vsel %vm244, %v1023, 0
        %v1042 = vsel %vm263, %v1014, 0
        %1044 = vmatprep.subr.mxu0 0.0
        %1045 = vmatpush1.msra.mxu0 %v1017
        %1046 = vmatprep.subr.mxu0 0.0
        %1047 = vmatpush1.msra.mxu0 %v1042
        %1048 = vmatprep.subr.mxu0 0.0
        %1049 = vmatpush1.msra.mxu0 0.0
        %1050 = vmatprep.subr.mxu0 0.0
        %1051 = vmatpush1.msra.mxu0 0.0
        %1052 = vmatprep.subr.mxu0 0.0
        %1053 = vmatpush1.msra.mxu0 0.0
        %1054 = vmatprep.subr.mxu0 0.0
        %1055 = vmatpush1.msra.mxu0 0.0
        %1056 = vmatprep.subr.mxu0 0.0
        %1057 = vmatpush1.msra.mxu0 0.0
        %1058 = vmatprep.subr.mxu0 0.0
        %1059 = vmatpush1.msra.mxu0 0.0
        %1060 = vmatprep.subr.mxu0 0.0
        %1061 = vmatpush1.msra.mxu0 0.0
        %1062 = vmatprep.subr.mxu0 0.0
        %1063 = vmatpush1.msra.mxu0 0.0
        %1064 = vmatprep.subr.mxu0 0.0
        %1065 = vmatpush1.msra.mxu0 0.0
        %1066 = vmatprep.subr.mxu0 0.0
        %1067 = vmatpush1.msra.mxu0 0.0
        %1068 = vmatprep.subr.mxu0 0.0
        %1069 = vmatpush1.msra.mxu0 0.0
        %1070 = vmatprep.subr.mxu0 0.0
        %1071 = vmatpush1.msra.mxu0 0.0
        %1072 = vmatprep.subr.mxu0 0.0
        %1073 = vmatpush1.msra.mxu0 0.0
        %1074 = vmatprep.subr.mxu0 0.0
        %1075 = vmatpush1.msra.mxu0 0.0
        %1076 = vmatprep.subr.mxu0 0.0
        %1077 = vmatpush1.msra.mxu0 0.0
        %1078 = vmatprep.subr.mxu0 0.0
        %1079 = vmatpush1.msra.mxu0 0.0
        %1080 = vmatprep.subr.mxu0 0.0
        %1081 = vmatpush1.msra.mxu0 0.0
        %1082 = vmatprep.subr.mxu0 0.0
        %1083 = vmatpush1.msra.mxu0 0.0
        %1084 = vmatprep.subr.mxu0 0.0
        %1085 = vmatpush1.msra.mxu0 0.0
        %1086 = vmatprep.subr.mxu0 0.0
        %1087 = vmatpush1.msra.mxu0 0.0
        %1088 = vmatprep.subr.mxu0 0.0
        %1089 = vmatpush1.msra.mxu0 0.0
        %1090 = vmatprep.subr.mxu0 0.0
        %1091 = vmatpush1.msra.mxu0 0.0
        %1092 = vmatprep.subr.mxu0 0.0
        %1093 = vmatpush1.msra.mxu0 0.0
        %1094 = vmatprep.subr.mxu0 0.0
        %1095 = vmatpush1.msra.mxu0 0.0
        %1096 = vmatprep.subr.mxu0 0.0
        %1097 = vmatpush1.msra.mxu0 0.0
        %1098 = vmatprep.subr.mxu0 0.0
        %1099 = vmatpush1.msra.mxu0 0.0
        %1100 = vmatprep.subr.mxu0 0.0
        %1101 = vmatpush1.msra.mxu0 0.0
        %1102 = vmatprep.subr.mxu0 0.0
        %1103 = vmatpush1.msra.mxu0 0.0
        %1104 = vmatprep.subr.mxu0 0.0
        %1105 = vmatpush1.msra.mxu0 0.0
        %1106 = vmatprep.subr.mxu0 0.0
        %1107 = vmatpush1.msra.mxu0 0.0
        %1108 = vmatprep.mubr.f32.mxu0 0.0
        %1109 = vmatmul.mubr.f32.gmra.mrb[0].mxu0 %v1025
        %v1110 = vpop.f32.mrb[0].mxu0
        %v1111 = vadd.f32 0.0, %v1110
        %v1112 = vpop.f32.mrb[0].mxu0
        %1113 = vmatprep.mubr.f32.mxu0 0.0
        %1114 = vmatmul.mubr.f32.gmra.mrb[0].mxu0 %v1028
        %v1115 = vpop.f32.mrb[0].mxu0
        %v1116 = vadd.f32 0.0, %v1115
        %v1117 = vpop.f32.mrb[0].mxu0
        %1118 = vmatprep.mubr.f32.mxu0 0.0
        %1119 = vmatmul.mubr.f32.gmra.mrb[0].mxu0 %v1031
        %v1120 = vpop.f32.mrb[0].mxu0
        %v1121 = vadd.f32 0.0, %v1120
        %v1122 = vpop.f32.mrb[0].mxu0
        %1123 = vmatprep.mubr.f32.mxu0 0.0
        %1124 = vmatmul.mubr.f32.gmra.mrb[0].mxu0 %v1034
        %v1125 = vpop.f32.mrb[0].mxu0
        %v1126 = vadd.f32 0.0, %v1125
        %v1127 = vpop.f32.mrb[0].mxu0
        %1128 = vmatprep.mubr.f32.mxu0 0.0
        %1129 = vmatmul.mubr.f32.gmra.mrb[0].mxu0 %v1037
        %v1130 = vpop.f32.mrb[0].mxu0
        %v1131 = vadd.f32 0.0, %v1130
        %v1132 = vpop.f32.mrb[0].mxu0
        %1133 = vmatprep.mubr.f32.mxu0 0.0
        %1134 = vmatmul.mubr.f32.gmra.mrb[0].mxu0 %v1040
        %v1135 = vpop.f32.mrb[0].mxu0
        %v1136 = vadd.f32 0.0, %v1135
        %v1137 = vpop.f32.mrb[0].mxu0
        %1138 = vdwg.mxu0
        %1141 = vrot.lane.b32.xlu0 %v1121, 127
        %v1142 = vpop.permute.xlu0 %1141
        %1143 = vrot.lane.b32.xlu0 %v1126, 127
        %v1144 = vpop.permute.xlu0 %1143
        %v1147 = vadd.f32 %v1111, %v1142
        %v1148 = vadd.f32 %v1116, %v1144
        %1151 = vrot.lane.b32.xlu0 %v1131, 126
        %v1152 = vpop.permute.xlu0 %1151
        %1153 = vrot.lane.b32.xlu0 %v1136, 126
        %v1154 = vpop.permute.xlu0 %1153
        %v1157 = vadd.f32 %v1147, %v1152
        %v1158 = vadd.f32 %v1148, %v1154
        %v1159 = vrot.slane %v218, 5
        %v1161 = vrot.slane %v222, 2
        %v1163 = vrot.slane %v226, 7
        %v1165 = vsel %vm234, %v1159, %v1161
        %v1166 = vsel %vm236, %v1165, %v1163
        %v1167 = vsel %vm263, %v1163, 0
        %1169 = vmatprep.subr.mxu0 0.0
        %1170 = vmatpush1.msra.mxu0 %v1166
        %1171 = vmatprep.subr.mxu0 0.0
        %1172 = vmatpush1.msra.mxu0 %v1167
        %1173 = vmatprep.subr.mxu0 0.0
        %1174 = vmatpush1.msra.mxu0 0.0
        %1175 = vmatprep.subr.mxu0 0.0
        %1176 = vmatpush1.msra.mxu0 0.0
        %1177 = vmatprep.subr.mxu0 0.0
        %1178 = vmatpush1.msra.mxu0 0.0
        %1179 = vmatprep.subr.mxu0 0.0
        %1180 = vmatpush1.msra.mxu0 0.0
        %1181 = vmatprep.subr.mxu0 0.0
        %1182 = vmatpush1.msra.mxu0 0.0
        %1183 = vmatprep.subr.mxu0 0.0
        %1184 = vmatpush1.msra.mxu0 0.0
        %1185 = vmatprep.subr.mxu0 0.0
        %1186 = vmatpush1.msra.mxu0 0.0
        %1187 = vmatprep.subr.mxu0 0.0
        %1188 = vmatpush1.msra.mxu0 0.0
        %1189 = vmatprep.subr.mxu0 0.0
        %1190 = vmatpush1.msra.mxu0 0.0
        %1191 = vmatprep.subr.mxu0 0.0
        %1192 = vmatpush1.msra.mxu0 0.0
        %1193 = vmatprep.subr.mxu0 0.0
        %1194 = vmatpush1.msra.mxu0 0.0
        %1195 = vmatprep.subr.mxu0 0.0
        %1196 = vmatpush1.msra.mxu0 0.0
        %1197 = vmatprep.subr.mxu0 0.0
        %1198 = vmatpush1.msra.mxu0 0.0
        %1199 = vmatprep.subr.mxu0 0.0
        %1200 = vmatpush1.msra.mxu0 0.0
        %1201 = vmatprep.subr.mxu0 0.0
        %1202 = vmatpush1.msra.mxu0 0.0
        %1203 = vmatprep.subr.mxu0 0.0
        %1204 = vmatpush1.msra.mxu0 0.0
        %1205 = vmatprep.subr.mxu0 0.0
        %1206 = vmatpush1.msra.mxu0 0.0
        %1207 = vmatprep.subr.mxu0 0.0
        %1208 = vmatpush1.msra.mxu0 0.0
        %1209 = vmatprep.subr.mxu0 0.0
        %1210 = vmatpush1.msra.mxu0 0.0
        %1211 = vmatprep.subr.mxu0 0.0
        %1212 = vmatpush1.msra.mxu0 0.0
        %1213 = vmatprep.subr.mxu0 0.0
        %1214 = vmatpush1.msra.mxu0 0.0
        %1215 = vmatprep.subr.mxu0 0.0
        %1216 = vmatpush1.msra.mxu0 0.0
        %1217 = vmatprep.subr.mxu0 0.0
        %1218 = vmatpush1.msra.mxu0 0.0
        %1219 = vmatprep.subr.mxu0 0.0
        %1220 = vmatpush1.msra.mxu0 0.0
        %1221 = vmatprep.subr.mxu0 0.0
        %1222 = vmatpush1.msra.mxu0 0.0
        %1223 = vmatprep.subr.mxu0 0.0
        %1224 = vmatpush1.msra.mxu0 0.0
        %1225 = vmatprep.subr.mxu0 0.0
        %1226 = vmatpush1.msra.mxu0 0.0
        %1227 = vmatprep.subr.mxu0 0.0
        %1228 = vmatpush1.msra.mxu0 0.0
        %1229 = vmatprep.subr.mxu0 0.0
        %1230 = vmatpush1.msra.mxu0 0.0
        %1231 = vmatprep.subr.mxu0 0.0
        %1232 = vmatpush1.msra.mxu0 0.0
        %1233 = vmatprep.mubr.f32.mxu0 0.0
        %1234 = vmatmul.mubr.f32.gmra.mrb[0].mxu0 %v1025
        %v1235 = vpop.f32.mrb[0].mxu0
        %v1236 = vadd.f32 0.0, %v1235
        %v1237 = vpop.f32.mrb[0].mxu0
        %1238 = vmatprep.mubr.f32.mxu0 0.0
        %1239 = vmatmul.mubr.f32.gmra.mrb[0].mxu0 %v1028
        %v1240 = vpop.f32.mrb[0].mxu0
        %v1241 = vadd.f32 0.0, %v1240
        %v1242 = vpop.f32.mrb[0].mxu0
        %1243 = vmatprep.mubr.f32.mxu0 0.0
        %1244 = vmatmul.mubr.f32.gmra.mrb[0].mxu0 %v1031
        %v1245 = vpop.f32.mrb[0].mxu0
        %v1246 = vadd.f32 0.0, %v1245
        %v1247 = vpop.f32.mrb[0].mxu0
        %1248 = vmatprep.mubr.f32.mxu0 0.0
        %1249 = vmatmul.mubr.f32.gmra.mrb[0].mxu0 %v1034
        %v1250 = vpop.f32.mrb[0].mxu0
        %v1251 = vadd.f32 0.0, %v1250
        %v1252 = vpop.f32.mrb[0].mxu0
        %1253 = vmatprep.mubr.f32.mxu0 0.0
        %1254 = vmatmul.mubr.f32.gmra.mrb[0].mxu0 %v1037
        %v1255 = vpop.f32.mrb[0].mxu0
        %v1256 = vadd.f32 0.0, %v1255
        %v1257 = vpop.f32.mrb[0].mxu0
        %1258 = vmatprep.mubr.f32.mxu0 0.0
        %1259 = vmatmul.mubr.f32.gmra.mrb[0].mxu0 %v1040
        %v1260 = vpop.f32.mrb[0].mxu0
        %v1261 = vadd.f32 0.0, %v1260
        %v1262 = vpop.f32.mrb[0].mxu0
        %1263 = vdwg.mxu0
        %1266 = vrot.lane.b32.xlu0 %v1246, 127
        %v1267 = vpop.permute.xlu0 %1266
        %1268 = vrot.lane.b32.xlu0 %v1251, 127
        %v1269 = vpop.permute.xlu0 %1268
        %v1272 = vadd.f32 %v1236, %v1267
        %v1273 = vadd.f32 %v1241, %v1269
        %1276 = vrot.lane.b32.xlu0 %v1256, 126
        %v1277 = vpop.permute.xlu0 %1276
        %1278 = vrot.lane.b32.xlu0 %v1261, 126
        %v1279 = vpop.permute.xlu0 %1278
        %v1282 = vadd.f32 %v1272, %v1277
        %v1283 = vadd.f32 %v1273, %v1279
        %v1284 = vmax.f32 %v1157, %v1282
        %v1285 = vmax.f32 %v1158, %v1283
        %1288 = vrot.lane.b32.xlu0 %v1284, 127
        %v1289 = vpop.permute.xlu0 %1288
        %1290 = vrot.lane.b32.xlu0 %v1285, 127
        %v1291 = vpop.permute.xlu0 %1290
        %v1294 = vmax.f32 %v1284, %v1289
        %v1295 = vmax.f32 %v1285, %v1291
        %v1296 = vld [vmem:[%s3] sm:$0xff]
        %v1297 = vld [vmem:[%s3 + $0x8] sm:$0x7f]
        %v1299 = vsel %vm521, %v1294, 0
        %v1302 = vsel %vm521, %v1295, 0
        %v1305 = vsel %vm528, %v1297, 0
        %1307 = vmatprep.subr.mxu0 0.0
        %1308 = vmatpush1.msra.mxu0 %v1296
        %1309 = vmatprep.subr.mxu0 0.0
        %1310 = vmatpush1.msra.mxu0 %v1305
        %1311 = vmatprep.subr.mxu0 0.0
        %1312 = vmatpush1.msra.mxu0 0.0
        %1313 = vmatprep.subr.mxu0 0.0
        %1314 = vmatpush1.msra.mxu0 0.0
        %1315 = vmatprep.subr.mxu0 0.0
        %1316 = vmatpush1.msra.mxu0 0.0
        %1317 = vmatprep.subr.mxu0 0.0
        %1318 = vmatpush1.msra.mxu0 0.0
        %1319 = vmatprep.subr.mxu0 0.0
        %1320 = vmatpush1.msra.mxu0 0.0
        %1321 = vmatprep.subr.mxu0 0.0
        %1322 = vmatpush1.msra.mxu0 0.0
        %1323 = vmatprep.subr.mxu0 0.0
        %1324 = vmatpush1.msra.mxu0 0.0
        %1325 = vmatprep.subr.mxu0 0.0
        %1326 = vmatpush1.msra.mxu0 0.0
        %1327 = vmatprep.subr.mxu0 0.0
        %1328 = vmatpush1.msra.mxu0 0.0
        %1329 = vmatprep.subr.mxu0 0.0
        %1330 = vmatpush1.msra.mxu0 0.0
        %1331 = vmatprep.subr.mxu0 0.0
        %1332 = vmatpush1.msra.mxu0 0.0
        %1333 = vmatprep.subr.mxu0 0.0
        %1334 = vmatpush1.msra.mxu0 0.0
        %1335 = vmatprep.subr.mxu0 0.0
        %1336 = vmatpush1.msra.mxu0 0.0
        %1337 = vmatprep.subr.mxu0 0.0
        %1338 = vmatpush1.msra.mxu0 0.0
        %1339 = vmatprep.subr.mxu0 0.0
        %1340 = vmatpush1.msra.mxu0 0.0
        %1341 = vmatprep.subr.mxu0 0.0
        %1342 = vmatpush1.msra.mxu0 0.0
        %1343 = vmatprep.subr.mxu0 0.0
        %1344 = vmatpush1.msra.mxu0 0.0
        %1345 = vmatprep.subr.mxu0 0.0
        %1346 = vmatpush1.msra.mxu0 0.0
        %1347 = vmatprep.subr.mxu0 0.0
        %1348 = vmatpush1.msra.mxu0 0.0
        %1349 = vmatprep.subr.mxu0 0.0
        %1350 = vmatpush1.msra.mxu0 0.0
        %1351 = vmatprep.subr.mxu0 0.0
        %1352 = vmatpush1.msra.mxu0 0.0
        %1353 = vmatprep.subr.mxu0 0.0
        %1354 = vmatpush1.msra.mxu0 0.0
        %1355 = vmatprep.subr.mxu0 0.0
        %1356 = vmatpush1.msra.mxu0 0.0
        %1357 = vmatprep.subr.mxu0 0.0
        %1358 = vmatpush1.msra.mxu0 0.0
        %1359 = vmatprep.subr.mxu0 0.0
        %1360 = vmatpush1.msra.mxu0 0.0
        %1361 = vmatprep.subr.mxu0 0.0
        %1362 = vmatpush1.msra.mxu0 0.0
        %1363 = vmatprep.subr.mxu0 0.0
        %1364 = vmatpush1.msra.mxu0 0.0
        %1365 = vmatprep.subr.mxu0 0.0
        %1366 = vmatpush1.msra.mxu0 0.0
        %1367 = vmatprep.subr.mxu0 0.0
        %1368 = vmatpush1.msra.mxu0 0.0
        %1369 = vmatprep.subr.mxu0 0.0
        %1370 = vmatpush1.msra.mxu0 0.0
        %1371 = vmatprep.mubr.f32.mxu0 0.0
        %1372 = vmatmul.mubr.f32.gmra.mrb[0].mxu0 %v1299
        %v1373 = vpop.f32.mrb[0].mxu0
        %v1374 = vadd.f32 %v203, %v1373
        %v1375 = vpop.f32.mrb[0].mxu0
        %1376 = vmatprep.mubr.f32.mxu0 0.0
        %1377 = vmatmul.mubr.f32.gmra.mrb[0].mxu0 %v1302
        %v1378 = vpop.f32.mrb[0].mxu0
        %v1379 = vadd.f32 %v208, %v1378
        %v1380 = vpop.f32.mrb[0].mxu0
        %1381 = vdwg.mxu0
        %v1382 = vmax.f32 %v1374, 0.0
        %v1383 = vmax.f32 %v1379, 0.0
        %v1384 = vpack.c.bf16 %v1383, %v1382
        %s1385 = sadd.s32 %s610, 2
        %v1387 = vunpack.c.l.b16 %v1384
        %v1388 = vunpack.c.h.b16 %v1384
        %v1389 = vpack.c.b16 %v1387, %v1387
        %v1390 = vpack.c.b16 %v1388, %v1388
        %s1393 = smul.u32 %s1385, 2
        %s1394 = smul.addr %s1393, 4
        %s1395 = scalar_lea.vmem %s197, %s1394
        %1396 = vst.msk [vmem:[%s1395] sm:$0xf] %vm621, %v1389
        %1397 = vst.msk [vmem:[%s1395 + $0x4] sm:$0xf] %vm621, %v1390
        %vm1399 = vcmask 1041408
        %v1400 = vrot.slane %v218, 6
        %v1401 = vrot.slane %v219, 6
        %v1402 = vsel %vm1399, %v1400, %v1401
        %vm1405 = vcmask 1044480
        %v1406 = vrot.slane %v222, 3
        %v1407 = vrot.slane %v223, 3
        %v1408 = vsel %vm1405, %v1406, %v1407
        %v1410 = vsel %vm234, %v1402, %v1408
        %v1411 = vsel %vm236, %v1410, %v226
        %v1412 = vld [vmem:[%s1] sm:$0xff]
        %v1413 = vld [vmem:[%s1 + $0x8] sm:$0xff]
        %v1414 = vld [vmem:[%s1 + $0x10] sm:$0xff]
        %v1415 = vld [vmem:[%s1 + $0x18] sm:$0xff]
        %v1416 = vld [vmem:[%s1 + $0x20] sm:$0xff]
        %v1417 = vld [vmem:[%s1 + $0x28] sm:$0xff]
        %v1419 = vsel %vm244, %v1412, 0
        %v1422 = vsel %vm244, %v1413, 0
        %v1425 = vsel %vm244, %v1414, 0
        %v1428 = vsel %vm244, %v1415, 0
        %v1431 = vsel %vm244, %v1416, 0
        %v1434 = vsel %vm244, %v1417, 0
        %v1437 = vsel %vm263, %v227, 0
        %1439 = vmatprep.subr.mxu0 0.0
        %1440 = vmatpush1.msra.mxu0 %v1411
        %1441 = vmatprep.subr.mxu0 0.0
        %1442 = vmatpush1.msra.mxu0 %v1437
        %1443 = vmatprep.subr.mxu0 0.0
        %1444 = vmatpush1.msra.mxu0 0.0
        %1445 = vmatprep.subr.mxu0 0.0
        %1446 = vmatpush1.msra.mxu0 0.0
        %1447 = vmatprep.subr.mxu0 0.0
        %1448 = vmatpush1.msra.mxu0 0.0
        %1449 = vmatprep.subr.mxu0 0.0
        %1450 = vmatpush1.msra.mxu0 0.0
        %1451 = vmatprep.subr.mxu0 0.0
        %1452 = vmatpush1.msra.mxu0 0.0
        %1453 = vmatprep.subr.mxu0 0.0
        %1454 = vmatpush1.msra.mxu0 0.0
        %1455 = vmatprep.subr.mxu0 0.0
        %1456 = vmatpush1.msra.mxu0 0.0
        %1457 = vmatprep.subr.mxu0 0.0
        %1458 = vmatpush1.msra.mxu0 0.0
        %1459 = vmatprep.subr.mxu0 0.0
        %1460 = vmatpush1.msra.mxu0 0.0
        %1461 = vmatprep.subr.mxu0 0.0
        %1462 = vmatpush1.msra.mxu0 0.0
        %1463 = vmatprep.subr.mxu0 0.0
        %1464 = vmatpush1.msra.mxu0 0.0
        %1465 = vmatprep.subr.mxu0 0.0
        %1466 = vmatpush1.msra.mxu0 0.0
        %1467 = vmatprep.subr.mxu0 0.0
        %1468 = vmatpush1.msra.mxu0 0.0
        %1469 = vmatprep.subr.mxu0 0.0
        %1470 = vmatpush1.msra.mxu0 0.0
        %1471 = vmatprep.subr.mxu0 0.0
        %1472 = vmatpush1.msra.mxu0 0.0
        %1473 = vmatprep.subr.mxu0 0.0
        %1474 = vmatpush1.msra.mxu0 0.0
        %1475 = vmatprep.subr.mxu0 0.0
        %1476 = vmatpush1.msra.mxu0 0.0
        %1477 = vmatprep.subr.mxu0 0.0
        %1478 = vmatpush1.msra.mxu0 0.0
        %1479 = vmatprep.subr.mxu0 0.0
        %1480 = vmatpush1.msra.mxu0 0.0
        %1481 = vmatprep.subr.mxu0 0.0
        %1482 = vmatpush1.msra.mxu0 0.0
        %1483 = vmatprep.subr.mxu0 0.0
        %1484 = vmatpush1.msra.mxu0 0.0
        %1485 = vmatprep.subr.mxu0 0.0
        %1486 = vmatpush1.msra.mxu0 0.0
        %1487 = vmatprep.subr.mxu0 0.0
        %1488 = vmatpush1.msra.mxu0 0.0
        %1489 = vmatprep.subr.mxu0 0.0
        %1490 = vmatpush1.msra.mxu0 0.0
        %1491 = vmatprep.subr.mxu0 0.0
        %1492 = vmatpush1.msra.mxu0 0.0
        %1493 = vmatprep.subr.mxu0 0.0
        %1494 = vmatpush1.msra.mxu0 0.0
        %1495 = vmatprep.subr.mxu0 0.0
        %1496 = vmatpush1.msra.mxu0 0.0
        %1497 = vmatprep.subr.mxu0 0.0
        %1498 = vmatpush1.msra.mxu0 0.0
        %1499 = vmatprep.subr.mxu0 0.0
        %1500 = vmatpush1.msra.mxu0 0.0
        %1501 = vmatprep.subr.mxu0 0.0
        %1502 = vmatpush1.msra.mxu0 0.0
        %1503 = vmatprep.mubr.f32.mxu0 0.0
        %1504 = vmatmul.mubr.f32.gmra.mrb[0].mxu0 %v1419
        %v1505 = vpop.f32.mrb[0].mxu0
        %v1506 = vadd.f32 0.0, %v1505
        %v1507 = vpop.f32.mrb[0].mxu0
        %1508 = vmatprep.mubr.f32.mxu0 0.0
        %1509 = vmatmul.mubr.f32.gmra.mrb[0].mxu0 %v1422
        %v1510 = vpop.f32.mrb[0].mxu0
        %v1511 = vadd.f32 0.0, %v1510
        %v1512 = vpop.f32.mrb[0].mxu0
        %1513 = vmatprep.mubr.f32.mxu0 0.0
        %1514 = vmatmul.mubr.f32.gmra.mrb[0].mxu0 %v1425
        %v1515 = vpop.f32.mrb[0].mxu0
        %v1516 = vadd.f32 0.0, %v1515
        %v1517 = vpop.f32.mrb[0].mxu0
        %1518 = vmatprep.mubr.f32.mxu0 0.0
        %1519 = vmatmul.mubr.f32.gmra.mrb[0].mxu0 %v1428
        %v1520 = vpop.f32.mrb[0].mxu0
        %v1521 = vadd.f32 0.0, %v1520
        %v1522 = vpop.f32.mrb[0].mxu0
        %1523 = vmatprep.mubr.f32.mxu0 0.0
        %1524 = vmatmul.mubr.f32.gmra.mrb[0].mxu0 %v1431
        %v1525 = vpop.f32.mrb[0].mxu0
        %v1526 = vadd.f32 0.0, %v1525
        %v1527 = vpop.f32.mrb[0].mxu0
        %1528 = vmatprep.mubr.f32.mxu0 0.0
        %1529 = vmatmul.mubr.f32.gmra.mrb[0].mxu0 %v1434
        %v1530 = vpop.f32.mrb[0].mxu0
        %v1531 = vadd.f32 0.0, %v1530
        %v1532 = vpop.f32.mrb[0].mxu0
        %1533 = vdwg.mxu0
        %1536 = vrot.lane.b32.xlu0 %v1516, 127
        %v1537 = vpop.permute.xlu0 %1536
        %1538 = vrot.lane.b32.xlu0 %v1521, 127
        %v1539 = vpop.permute.xlu0 %1538
        %v1542 = vadd.f32 %v1506, %v1537
        %v1543 = vadd.f32 %v1511, %v1539
        %1546 = vrot.lane.b32.xlu0 %v1526, 126
        %v1547 = vpop.permute.xlu0 %1546
        %1548 = vrot.lane.b32.xlu0 %v1531, 126
        %v1549 = vpop.permute.xlu0 %1548
        %v1552 = vadd.f32 %v1542, %v1547
        %v1553 = vadd.f32 %v1543, %v1549
        %v1554 = vrot.slane %v218, 7
        %v1555 = vrot.slane %v219, 7
        %v1556 = vsel %vm263, %v1554, %v1555
        %vm1558 = vcmask 1043456
        %v1559 = vrot.slane %v222, 4
        %v1560 = vrot.slane %v223, 4
        %v1561 = vsel %vm1558, %v1559, %v1560
        %v1563 = vrot.slane %v226, 1
        %v1564 = vrot.slane %v227, 1
        %v1565 = vsel %vm528, %v1563, %v1564
        %v1567 = vsel %vm234, %v1556, %v1561
        %v1568 = vsel %vm236, %v1567, %v1565
        %v1569 = vsel %vm263, %v1564, 0
        %1571 = vmatprep.subr.mxu0 0.0
        %1572 = vmatpush1.msra.mxu0 %v1568
        %1573 = vmatprep.subr.mxu0 0.0
        %1574 = vmatpush1.msra.mxu0 %v1569
        %1575 = vmatprep.subr.mxu0 0.0
        %1576 = vmatpush1.msra.mxu0 0.0
        %1577 = vmatprep.subr.mxu0 0.0
        %1578 = vmatpush1.msra.mxu0 0.0
        %1579 = vmatprep.subr.mxu0 0.0
        %1580 = vmatpush1.msra.mxu0 0.0
        %1581 = vmatprep.subr.mxu0 0.0
        %1582 = vmatpush1.msra.mxu0 0.0
        %1583 = vmatprep.subr.mxu0 0.0
        %1584 = vmatpush1.msra.mxu0 0.0
        %1585 = vmatprep.subr.mxu0 0.0
        %1586 = vmatpush1.msra.mxu0 0.0
        %1587 = vmatprep.subr.mxu0 0.0
        %1588 = vmatpush1.msra.mxu0 0.0
        %1589 = vmatprep.subr.mxu0 0.0
        %1590 = vmatpush1.msra.mxu0 0.0
        %1591 = vmatprep.subr.mxu0 0.0
        %1592 = vmatpush1.msra.mxu0 0.0
        %1593 = vmatprep.subr.mxu0 0.0
        %1594 = vmatpush1.msra.mxu0 0.0
        %1595 = vmatprep.subr.mxu0 0.0
        %1596 = vmatpush1.msra.mxu0 0.0
        %1597 = vmatprep.subr.mxu0 0.0
        %1598 = vmatpush1.msra.mxu0 0.0
        %1599 = vmatprep.subr.mxu0 0.0
        %1600 = vmatpush1.msra.mxu0 0.0
        %1601 = vmatprep.subr.mxu0 0.0
        %1602 = vmatpush1.msra.mxu0 0.0
        %1603 = vmatprep.subr.mxu0 0.0
        %1604 = vmatpush1.msra.mxu0 0.0
        %1605 = vmatprep.subr.mxu0 0.0
        %1606 = vmatpush1.msra.mxu0 0.0
        %1607 = vmatprep.subr.mxu0 0.0
        %1608 = vmatpush1.msra.mxu0 0.0
        %1609 = vmatprep.subr.mxu0 0.0
        %1610 = vmatpush1.msra.mxu0 0.0
        %1611 = vmatprep.subr.mxu0 0.0
        %1612 = vmatpush1.msra.mxu0 0.0
        %1613 = vmatprep.subr.mxu0 0.0
        %1614 = vmatpush1.msra.mxu0 0.0
        %1615 = vmatprep.subr.mxu0 0.0
        %1616 = vmatpush1.msra.mxu0 0.0
        %1617 = vmatprep.subr.mxu0 0.0
        %1618 = vmatpush1.msra.mxu0 0.0
        %1619 = vmatprep.subr.mxu0 0.0
        %1620 = vmatpush1.msra.mxu0 0.0
        %1621 = vmatprep.subr.mxu0 0.0
        %1622 = vmatpush1.msra.mxu0 0.0
        %1623 = vmatprep.subr.mxu0 0.0
        %1624 = vmatpush1.msra.mxu0 0.0
        %1625 = vmatprep.subr.mxu0 0.0
        %1626 = vmatpush1.msra.mxu0 0.0
        %1627 = vmatprep.subr.mxu0 0.0
        %1628 = vmatpush1.msra.mxu0 0.0
        %1629 = vmatprep.subr.mxu0 0.0
        %1630 = vmatpush1.msra.mxu0 0.0
        %1631 = vmatprep.subr.mxu0 0.0
        %1632 = vmatpush1.msra.mxu0 0.0
        %1633 = vmatprep.subr.mxu0 0.0
        %1634 = vmatpush1.msra.mxu0 0.0
        %1635 = vmatprep.mubr.f32.mxu0 0.0
        %1636 = vmatmul.mubr.f32.gmra.mrb[0].mxu0 %v1419
        %v1637 = vpop.f32.mrb[0].mxu0
        %v1638 = vadd.f32 0.0, %v1637
        %v1639 = vpop.f32.mrb[0].mxu0
        %1640 = vmatprep.mubr.f32.mxu0 0.0
        %1641 = vmatmul.mubr.f32.gmra.mrb[0].mxu0 %v1422
        %v1642 = vpop.f32.mrb[0].mxu0
        %v1643 = vadd.f32 0.0, %v1642
        %v1644 = vpop.f32.mrb[0].mxu0
        %1645 = vmatprep.mubr.f32.mxu0 0.0
        %1646 = vmatmul.mubr.f32.gmra.mrb[0].mxu0 %v1425
        %v1647 = vpop.f32.mrb[0].mxu0
        %v1648 = vadd.f32 0.0, %v1647
        %v1649 = vpop.f32.mrb[0].mxu0
        %1650 = vmatprep.mubr.f32.mxu0 0.0
        %1651 = vmatmul.mubr.f32.gmra.mrb[0].mxu0 %v1428
        %v1652 = vpop.f32.mrb[0].mxu0
        %v1653 = vadd.f32 0.0, %v1652
        %v1654 = vpop.f32.mrb[0].mxu0
        %1655 = vmatprep.mubr.f32.mxu0 0.0
        %1656 = vmatmul.mubr.f32.gmra.mrb[0].mxu0 %v1431
        %v1657 = vpop.f32.mrb[0].mxu0
        %v1658 = vadd.f32 0.0, %v1657
        %v1659 = vpop.f32.mrb[0].mxu0
        %1660 = vmatprep.mubr.f32.mxu0 0.0
        %1661 = vmatmul.mubr.f32.gmra.mrb[0].mxu0 %v1434
        %v1662 = vpop.f32.mrb[0].mxu0
        %v1663 = vadd.f32 0.0, %v1662
        %v1664 = vpop.f32.mrb[0].mxu0
        %1665 = vdwg.mxu0
        %1668 = vrot.lane.b32.xlu0 %v1648, 127
        %v1669 = vpop.permute.xlu0 %1668
        %1670 = vrot.lane.b32.xlu0 %v1653, 127
        %v1671 = vpop.permute.xlu0 %1670
        %v1674 = vadd.f32 %v1638, %v1669
        %v1675 = vadd.f32 %v1643, %v1671
        %1678 = vrot.lane.b32.xlu0 %v1658, 126
        %v1679 = vpop.permute.xlu0 %1678
        %1680 = vrot.lane.b32.xlu0 %v1663, 126
        %v1681 = vpop.permute.xlu0 %1680
        %v1684 = vadd.f32 %v1674, %v1679
        %v1685 = vadd.f32 %v1675, %v1681
        %v1686 = vmax.f32 %v1552, %v1684
        %v1687 = vmax.f32 %v1553, %v1685
        %1690 = vrot.lane.b32.xlu0 %v1686, 127
        %v1691 = vpop.permute.xlu0 %1690
        %1692 = vrot.lane.b32.xlu0 %v1687, 127
        %v1693 = vpop.permute.xlu0 %1692
        %v1696 = vmax.f32 %v1686, %v1691
        %v1697 = vmax.f32 %v1687, %v1693
        %v1698 = vld [vmem:[%s3] sm:$0xff]
        %v1699 = vld [vmem:[%s3 + $0x8] sm:$0x7f]
        %v1701 = vsel %vm521, %v1696, 0
        %v1704 = vsel %vm521, %v1697, 0
        %v1707 = vsel %vm528, %v1699, 0
        %1709 = vmatprep.subr.mxu0 0.0
        %1710 = vmatpush1.msra.mxu0 %v1698
        %1711 = vmatprep.subr.mxu0 0.0
        %1712 = vmatpush1.msra.mxu0 %v1707
        %1713 = vmatprep.subr.mxu0 0.0
        %1714 = vmatpush1.msra.mxu0 0.0
        %1715 = vmatprep.subr.mxu0 0.0
        %1716 = vmatpush1.msra.mxu0 0.0
        %1717 = vmatprep.subr.mxu0 0.0
        %1718 = vmatpush1.msra.mxu0 0.0
        %1719 = vmatprep.subr.mxu0 0.0
        %1720 = vmatpush1.msra.mxu0 0.0
        %1721 = vmatprep.subr.mxu0 0.0
        %1722 = vmatpush1.msra.mxu0 0.0
        %1723 = vmatprep.subr.mxu0 0.0
        %1724 = vmatpush1.msra.mxu0 0.0
        %1725 = vmatprep.subr.mxu0 0.0
        %1726 = vmatpush1.msra.mxu0 0.0
        %1727 = vmatprep.subr.mxu0 0.0
        %1728 = vmatpush1.msra.mxu0 0.0
        %1729 = vmatprep.subr.mxu0 0.0
        %1730 = vmatpush1.msra.mxu0 0.0
        %1731 = vmatprep.subr.mxu0 0.0
        %1732 = vmatpush1.msra.mxu0 0.0
        %1733 = vmatprep.subr.mxu0 0.0
        %1734 = vmatpush1.msra.mxu0 0.0
        %1735 = vmatprep.subr.mxu0 0.0
        %1736 = vmatpush1.msra.mxu0 0.0
        %1737 = vmatprep.subr.mxu0 0.0
        %1738 = vmatpush1.msra.mxu0 0.0
        %1739 = vmatprep.subr.mxu0 0.0
        %1740 = vmatpush1.msra.mxu0 0.0
        %1741 = vmatprep.subr.mxu0 0.0
        %1742 = vmatpush1.msra.mxu0 0.0
        %1743 = vmatprep.subr.mxu0 0.0
        %1744 = vmatpush1.msra.mxu0 0.0
        %1745 = vmatprep.subr.mxu0 0.0
        %1746 = vmatpush1.msra.mxu0 0.0
        %1747 = vmatprep.subr.mxu0 0.0
        %1748 = vmatpush1.msra.mxu0 0.0
        %1749 = vmatprep.subr.mxu0 0.0
        %1750 = vmatpush1.msra.mxu0 0.0
        %1751 = vmatprep.subr.mxu0 0.0
        %1752 = vmatpush1.msra.mxu0 0.0
        %1753 = vmatprep.subr.mxu0 0.0
        %1754 = vmatpush1.msra.mxu0 0.0
        %1755 = vmatprep.subr.mxu0 0.0
        %1756 = vmatpush1.msra.mxu0 0.0
        %1757 = vmatprep.subr.mxu0 0.0
        %1758 = vmatpush1.msra.mxu0 0.0
        %1759 = vmatprep.subr.mxu0 0.0
        %1760 = vmatpush1.msra.mxu0 0.0
        %1761 = vmatprep.subr.mxu0 0.0
        %1762 = vmatpush1.msra.mxu0 0.0
        %1763 = vmatprep.subr.mxu0 0.0
        %1764 = vmatpush1.msra.mxu0 0.0
        %1765 = vmatprep.subr.mxu0 0.0
        %1766 = vmatpush1.msra.mxu0 0.0
        %1767 = vmatprep.subr.mxu0 0.0
        %1768 = vmatpush1.msra.mxu0 0.0
        %1769 = vmatprep.subr.mxu0 0.0
        %1770 = vmatpush1.msra.mxu0 0.0
        %1771 = vmatprep.subr.mxu0 0.0
        %1772 = vmatpush1.msra.mxu0 0.0
        %1773 = vmatprep.mubr.f32.mxu0 0.0
        %1774 = vmatmul.mubr.f32.gmra.mrb[0].mxu0 %v1701
        %v1775 = vpop.f32.mrb[0].mxu0
        %v1776 = vadd.f32 %v203, %v1775
        %v1777 = vpop.f32.mrb[0].mxu0
        %1778 = vmatprep.mubr.f32.mxu0 0.0
        %1779 = vmatmul.mubr.f32.gmra.mrb[0].mxu0 %v1704
        %v1780 = vpop.f32.mrb[0].mxu0
        %v1781 = vadd.f32 %v208, %v1780
        %v1782 = vpop.f32.mrb[0].mxu0
        %1783 = vdwg.mxu0
        %v1784 = vmax.f32 %v1776, 0.0
        %v1785 = vmax.f32 %v1781, 0.0
        %v1786 = vpack.c.bf16 %v1785, %v1784
        %s1787 = sadd.s32 %s610, 3
        %v1789 = vunpack.c.l.b16 %v1786
        %v1790 = vunpack.c.h.b16 %v1786
        %v1791 = vpack.c.b16 %v1789, %v1789
        %v1792 = vpack.c.b16 %v1790, %v1790
        %s1795 = smul.u32 %s1787, 2
        %s1796 = smul.addr %s1795, 4
        %s1797 = scalar_lea.vmem %s197, %s1796
        %1798 = vst.msk [vmem:[%s1797] sm:$0xf] %vm621, %v1791
        %1799 = vst.msk [vmem:[%s1797 + $0x4] sm:$0xf] %vm621, %v1792
      $region41: #{simple_card_classifier_forward.2} parent=35 // loop_footer
        %s215 = sadd.s32 1, %s211
      $region42: #{simple_card_classifier_forward.2} parent=35 // loop_footer_branch
        %210 = sbr.rel target = $region38
      $region43: #{simple_card_classifier_forward.2} parent=35 // loop_exit
        _
      %p1800 = scmp.lt.s32.totalorder %s15, 1
      %s1801 = scalar_select %p1800, %s15, 1
      %s1802 = smul.addr %s1801, 16
      %s1803 = smul.addr %s1802, 4
      %s1804 = scalar_lea.vmem %s4, %s1803
      // Predicated region
      $region44: #{simple_card_classifier_forward.2} parent=35 // pred_check
        %p1805 = pneg %p122
      $region45: #{simple_card_classifier_forward.2} parent=35 // pred_check_branch
        %1807 = sbr.rel (%p1805) target = $region47
      $region46: #{simple_card_classifier_forward.2} parent=35 // pred_region
        _
      $region47: #{simple_card_classifier_forward.2} parent=35 // pred_fallthru
        _
    $region36: #{simple_card_classifier_forward.2} parent=5 // pred_fallthru
      _
    %p1808 = scmp.le.s32.totalorder 2, %s10
    // Predicated region
    $region48: #{simple_card_classifier_forward.2} parent=5 // pred_check
      %p1809 = pneg %p1808
    $region49: #{simple_card_classifier_forward.2} parent=5 // pred_check_branch
      %1811 = sbr.rel (%p1809) target = $region51
    $region50: #{simple_card_classifier_forward.2} parent=5 // pred_region
      %s1812 = ssub.s32 %s10, 2
      // Predicated region
      $region52: #{simple_card_classifier_forward.2} parent=50 // pred_check
        %p1813 = pneg %p128
      $region53: #{simple_card_classifier_forward.2} parent=50 // pred_check_branch
        %1815 = sbr.rel (%p1813) target = $region55
      $region54: #{simple_card_classifier_forward.2} parent=50 // pred_region
        %p1816 = scmp.lt.s32.totalorder %s16, 1
        %s1817 = scalar_select %p1816, %s16, 1
        %s1818 = smul.addr %s1817, 16
        %s1819 = smul.addr %s1818, 4
        %s1820 = scalar_lea.vmem %s4, %s1819
      $region55: #{simple_card_classifier_forward.2} parent=50 // pred_fallthru
        _
    $region51: #{simple_card_classifier_forward.2} parent=5 // pred_fallthru
      _
  $region6: #{simple_card_classifier_forward.2} parent=0 // loop_footer
    %s14 = sadd.s32 1, %s10
  $region7: #{simple_card_classifier_forward.2} parent=0 // loop_footer_branch
    %9 = sbr.rel target = $region3
  $region8: #{simple_card_classifier_forward.2} parent=0 // loop_exit
    _

</llo_original>
